<compile_context>
chip_gen: v7x
topology: tpu7x:2x2x1
jax: 0.10.0
libtpu: 0.0.40
codegen_flags: <defaults>
</compile_context>

<pallas_src>
import functools

import jax
import jax.numpy as jnp
import numpy as np
from jax.experimental import pallas as pl
from jax.experimental.pallas import tpu as pltpu


# ----------------------------------------------------------------------------
# Fused kernel: one batch-block (Nper images, merged into lanes) per grid step.
# ----------------------------------------------------------------------------
def _tgasm_kernel(M, Ch, C, W, L, NPER,
                  x_ref, mask_ref, wtap_ref, vec_ref, fc1w_ref,
                  pool_ref, expand_ref, scal_ref,
                  maps_ref, sc_ref):

    def stack9(z):
        """z: (C_in, L) -> (9*C_in, L) masked/shifted tap stack (tap-major).

        Tap t = ki*3+kj reads flat offset (ki-1)*W+(kj-1); the precomputed
        mask zeroes the halo AND isolates neighbouring images in the lane axis.
        """
        parts = []
        for ki in range(3):
            for kj in range(3):
                t = ki * 3 + kj
                off = (ki - 1) * W + (kj - 1)
                if off == 0:
                    parts.append(z)
                else:
                    parts.append(pltpu.roll(z, (-off) % L, axis=1) * mask_ref[t])
        return jnp.concatenate(parts, axis=0)

    x = x_ref[...]                                       # (C, L)
    wt = wtap_ref[...]                                   # (C, 9*C) packed taps

    # unpack the bias / small-vector slab (static slices)
    v = vec_ref[...]                                     # (5M+2Ch+3, 1)
    o = [0]

    def take(n):
        s = v[o[0]:o[0] + n]
        o[0] += n
        return s

    b1, b2, w3, b3 = take(M), take(M), take(M), take(1)
    bsg, wfin, bfin = take(Ch), take(Ch), take(1)
    fc1b, fc2w, fc2b = take(M), take(M), take(1)

    # --- BoundaryAwareModule: (conv3x3+BN+ReLU) x2, 1x1 conv, sigmoid, resid --
    f1 = jnp.maximum(
        jnp.dot(wt[0:M, :], stack9(x),
                preferred_element_type=jnp.float32) + b1, 0.0)          # (M, L)
    f2 = jnp.maximum(
        jnp.dot(wt[M:2 * M, 0:9 * M], stack9(f1),
                preferred_element_type=jnp.float32) + b2, 0.0)          # (M, L)
    edge = jax.nn.sigmoid(jnp.sum(w3 * f2, axis=0, keepdims=True) + b3)  # (1, L)
    x_enh = x * (edge + 1.0)                             # == x*edge + x

    # --- texture gate: per-image avg pool -> Linear/ReLU/Linear/Sigmoid ------
    pooled = jnp.dot(x_enh, pool_ref[...],
                     preferred_element_type=jnp.float32)                 # (C, NPER)
    h = jnp.maximum(
        jnp.dot(fc1w_ref[...], pooled,
                preferred_element_type=jnp.float32) + fc1b, 0.0)         # (M, NPER)
    cplx = jax.nn.sigmoid(jnp.sum(fc2w * h, axis=0, keepdims=True) + fc2b)  # (1, NPER)

    base, rng, temp = scal_ref[0], scal_ref[1], scal_ref[2]
    thr = jnp.clip(base + (cplx - 0.5) * rng, 0.1, 0.9)                  # (1, NPER)

    # broadcast each image's threshold over its lanes (static unroll, VPU only)
    thr_pos = thr[:, 0:1] * expand_ref[0:1, :]
    for i in range(1, NPER):
        thr_pos = thr_pos + thr[:, i:i + 1] * expand_ref[i:i + 1, :]     # (1, L)

    # --- segmentation head: conv3x3+BN+ReLU, 1x1 conv, soft threshold --------
    fs = jnp.maximum(
        jnp.dot(wt[2 * M:2 * M + Ch, :], stack9(x_enh),
                preferred_element_type=jnp.float32) + bsg, 0.0)          # (Ch, L)
    logits = jnp.sum(wfin * fs, axis=0, keepdims=True) + bfin            # (1, L)
    prob = jax.nn.sigmoid(logits)
    prob = jnp.where(jnp.isnan(prob), jnp.zeros_like(prob), prob)
    bin_logits = (prob - thr_pos + 1e-6) * temp
    bin_map = jax.nn.sigmoid(bin_logits)

    # packed, lane-dense outputs (single 4-sublane store + one tiny store)
    maps_ref[...] = jnp.concatenate([logits, prob, bin_map, bin_logits], axis=0)
    sc_ref[...] = jnp.concatenate([thr, cplx], axis=0)


# ----------------------------------------------------------------------------
# Host-side helpers
# ----------------------------------------------------------------------------
def _fold_bn(w, b, gamma, beta, running_mean, running_var, eps=1e-5):
    scale = gamma / jnp.sqrt(running_var + eps)
    return w * scale[:, None, None, None], (b - running_mean) * scale + beta


def _tap_masks(H, W, n_rep):
    """(9, 1, n_rep*H*W) f32: 1 where tap (ki,kj) reads in-bounds inside each
    image, 0 on the halo; tiled n_rep times for batch-merged lanes."""
    m = np.zeros((9, 1, H * W), np.float32)
    for ki in range(3):
        for kj in range(3):
            di, dj = ki - 1, kj - 1
            valid = np.zeros((H, W), np.float32)
            valid[max(0, -di):H - max(0, di), max(0, -dj):W - max(0, dj)] = 1.0
            m[ki * 3 + kj, 0] = valid.reshape(-1)
    return np.tile(m, (1, 1, n_rep))


def _tap_matrix(w):
    """(C_out, C_in, 3, 3) -> (C_out, 9*C_in), tap-major columns matching the
    stack9() row order inside the kernel."""
    co, ci = w.shape[0], w.shape[1]
    return jnp.transpose(w, (0, 2, 3, 1)).reshape(co, 9 * ci)


def _const_spec(shape):
    nd = len(shape)
    return pl.BlockSpec(shape, lambda g, _d=nd: (0,) * _d)


def _num_batch_blocks(N):
    """Use 2 parallel batch blocks on 2-TensorCore chips (v7x), else 1."""
    if N < 2 or N % 2 != 0:
        return 1
    try:
        kind = jax.devices()[0].device_kind.lower()
    except Exception:
        return 1
    return 2 if "v7" in kind else 1


def tgasm_forward(x, p, num_batch_blocks=None):
    N, C, H, W = x.shape
    M, Ch, HW = C // 4, C // 2, H * W
    NB = _num_batch_blocks(N) if num_batch_blocks is None else num_batch_blocks
    Nper = N // NB
    L = Nper * HW                                   # lanes per grid step

    # BN folded into the convs (eval mode)
    w1f, b1f = _fold_bn(p["w1"], p["b1"], p["g1"], p["be1"], p["rm1"], p["rv1"])
    w2f, b2f = _fold_bn(p["w2"], p["b2"], p["g2"], p["be2"], p["rm2"], p["rv2"])
    wsf, bsf = _fold_bn(p["w_seg"], p["b_seg"], p["g_seg"], p["be_seg"],
                        p["rm_seg"], p["rv_seg"])

    # one packed tap-weight matrix: rows [w1 | w2 (cols 0:9M) | w_seg]
    w_taps = jnp.zeros((C, 9 * C), jnp.float32)
    w_taps = w_taps.at[0:M, :].set(_tap_matrix(w1f))
    w_taps = w_taps.at[M:2 * M, 0:9 * M].set(_tap_matrix(w2f))
    w_taps = w_taps.at[2 * M:2 * M + Ch, :].set(_tap_matrix(wsf))

    # one packed bias / small-vector slab (order must match kernel `take`s)
    vecs = jnp.concatenate([
        b1f, b2f,
        p["w3"].reshape(M), p["b3"].reshape(1),
        bsf,
        p["w_fin"].reshape(Ch), p["b_fin"].reshape(1),
        p["fc1_b"].reshape(M),
        p["fc2_w"].reshape(M), p["fc2_b"].reshape(1),
    ]).reshape(-1, 1).astype(jnp.float32)

    # per-image pooling / broadcast constants (batch merged into lanes)
    onehot = np.repeat(np.eye(Nper, dtype=np.float32), HW, axis=1)   # (Nper, L)
    pool_mat = jnp.asarray(onehot.T / HW)                            # (L, Nper)
    expand_mat = jnp.asarray(onehot)                                 # (Nper, L)

    # activations: batch folded into the lane axis -> (C, N*HW)
    x_l = jnp.transpose(x, (1, 0, 2, 3)).reshape(C, N * HW).astype(jnp.float32)

    scal = jnp.stack([p["base_threshold"], p["threshold_range"],
                      p["temperature"]]).astype(jnp.float32)

    inputs = (x_l, jnp.asarray(_tap_masks(H, W, Nper)), w_taps, vecs,
              p["fc1_w"].astype(jnp.float32), pool_mat, expand_mat, scal)

    in_specs = [pl.BlockSpec((C, L), lambda g: (0, g))]              # activations
    in_specs += [_const_spec(a.shape) for a in inputs[1:-1]]         # VMEM consts
    in_specs += [pl.BlockSpec(memory_space=pltpu.MemorySpace.SMEM)]  # scalars

    out_specs = (
        pl.BlockSpec((4, L), lambda g: (0, g)),                      # packed maps
        pl.BlockSpec((None, 2, Nper), lambda g: (g, 0, 0)),          # thr/cplx
    )

    maps, sc = pl.pallas_call(
        functools.partial(_tgasm_kernel, M, Ch, C, W, L, Nper),
        out_shape=(jax.ShapeDtypeStruct((4, N * HW), jnp.float32),
                   jax.ShapeDtypeStruct((NB, 2, Nper), jnp.float32)),
        grid=(NB,),
        in_specs=in_specs,
        out_specs=out_specs,
        compiler_params=pltpu.CompilerParams(
            dimension_semantics=("parallel",)),
    )(*inputs)

    return {
        "logits": maps[0].reshape(N, 1, H, W),
        "prob_map": maps[1].reshape(N, 1, H, W),
        "binary_map": maps[2].reshape(N, 1, H, W),
        "binary_logits": maps[3].reshape(N, 1, H, W),
        "threshold": sc[:, 0, :].reshape(N, 1),
        "complexity": sc[:, 1, :].reshape(N, 1),
    }


# ----------------------------------------------------------------------------
# Pure-JAX reference (mirrors the PyTorch TGASM forward, BN in eval mode)
# ----------------------------------------------------------------------------
def reference_forward(x, p, eps=1e-5):
    def conv(z, w, b, pad):
        y = jax.lax.conv_general_dilated(
            z, w, (1, 1), [(pad, pad), (pad, pad)],
            dimension_numbers=("NCHW", "OIHW", "NCHW"))
        return y + b[None, :, None, None]

    def bn(y, g, be, rm, rv):
        return ((y - rm[None, :, None, None])
                * (g / jnp.sqrt(rv + eps))[None, :, None, None]
                + be[None, :, None, None])

    # BoundaryAwareModule
    f = jax.nn.relu(bn(conv(x, p["w1"], p["b1"], 1),
                       p["g1"], p["be1"], p["rm1"], p["rv1"]))
    f = jax.nn.relu(bn(conv(f, p["w2"], p["b2"], 1),
                       p["g2"], p["be2"], p["rm2"], p["rv2"]))
    edge = jax.nn.sigmoid(conv(f, p["w3"], p["b3"], 0))
    x_enh = x * edge + x

    # texture gate
    tex = jnp.mean(x_enh, axis=(2, 3))                               # (N, C)
    h = jax.nn.relu(tex @ p["fc1_w"].T + p["fc1_b"])
    complexity = jax.nn.sigmoid(h @ p["fc2_w"].T + p["fc2_b"])       # (N, 1)
    threshold = jnp.clip(
        p["base_threshold"] + (complexity - 0.5) * p["threshold_range"],
        0.1, 0.9)

    # segmentation head
    fs = jax.nn.relu(bn(conv(x_enh, p["w_seg"], p["b_seg"], 1),
                        p["g_seg"], p["be_seg"], p["rm_seg"], p["rv_seg"]))
    logits = conv(fs, p["w_fin"], p["b_fin"], 0)
    prob = jax.nn.sigmoid(logits)
    prob = jnp.where(jnp.isnan(prob), jnp.zeros_like(prob), prob)
    binary_logits = (prob - threshold[:, :, None, None] + 1e-6) * p["temperature"]
    binary_map = jax.nn.sigmoid(binary_logits)
    return {"logits": logits, "prob_map": prob, "binary_map": binary_map,
            "binary_logits": binary_logits, "threshold": threshold,
            "complexity": complexity}


# ----------------------------------------------------------------------------
if __name__ == "__main__":
    key = jax.random.PRNGKey(0)
    N, C, H, W = 2, 8, 16, 16            # in_channels=8 -> mid=2, half=4
    M, Ch = C // 4, C // 2

    keys = iter(jax.random.split(key, 40))

    def nrm(shape, s=0.1):
        return s * jax.random.normal(next(keys), shape, jnp.float32)

    def pos(shape):
        return 1.0 + 0.2 * jax.random.uniform(next(keys), shape, jnp.float32)

    x = jax.random.normal(next(keys), (N, C, H, W), jnp.float32)

    params = {
        # BoundaryAwareModule
        "w1": nrm((M, C, 3, 3)), "b1": nrm((M,)),
        "g1": pos((M,)), "be1": nrm((M,)), "rm1": nrm((M,)), "rv1": pos((M,)),
        "w2": nrm((M, M, 3, 3)), "b2": nrm((M,)),
        "g2": pos((M,)), "be2": nrm((M,)), "rm2": nrm((M,)), "rv2": pos((M,)),
        "w3": nrm((1, M, 1, 1)), "b3": nrm((1,)),
        # texture gate
        "fc1_w": nrm((M, C)), "fc1_b": nrm((M,)),
        "fc2_w": nrm((1, M)), "fc2_b": nrm((1,)),
        # segmentation head
        "w_seg": nrm((Ch, C, 3, 3)), "b_seg": nrm((Ch,)),
        "g_seg": pos((Ch,)), "be_seg": nrm((Ch,)),
        "rm_seg": nrm((Ch,)), "rv_seg": pos((Ch,)),
        "w_fin": nrm((1, Ch, 1, 1)), "b_fin": nrm((1,)),
        # scalar parameters
        "base_threshold": jnp.float32(0.5),
        "threshold_range": jnp.float32(0.2),
        "temperature": jnp.float32(5.0),
    }

    out = jax.block_until_ready(tgasm_forward(x, params))
    ref = jax.block_until_ready(reference_forward(x, params))

    for k in ("logits", "prob_map", "binary_map", "binary_logits",
              "threshold", "complexity"):
        np.testing.assert_allclose(np.asarray(out[k]), np.asarray(ref[k]),
                                   rtol=1e-3, atol=1e-4, err_msg=k)
    assert out["logits"].shape == (N, 1, H, W)
    assert out["threshold"].shape == (N, 1)
    assert out["logits"].dtype == x.dtype
    print("KERNEL_OK")
</pallas_src>

<mosaic_0001>
module attributes {stable_mosaic.version = 11 : i64} {
  func.func @_tgasm_kernel(%arg0: i32, %arg1: memref<8x512xf32, #tpu.memory_space<vmem>>, %arg2: memref<9x1x512xf32, #tpu.memory_space<vmem>>, %arg3: memref<8x72xf32, #tpu.memory_space<vmem>>, %arg4: memref<21x1xf32, #tpu.memory_space<vmem>>, %arg5: memref<2x8xf32, #tpu.memory_space<vmem>>, %arg6: memref<512x2xf32, #tpu.memory_space<vmem>>, %arg7: memref<2x512xf32, #tpu.memory_space<vmem>>, %arg8: memref<3xf32, #tpu.memory_space<smem>>, %arg9: memref<4x512xf32, #tpu.memory_space<vmem>>, %arg10: memref<1x2x2xf32, #tpu.memory_space<vmem>>) attributes {dimension_semantics = [#tpu.dimension_semantics<parallel>], iteration_bounds = array<i64: 1>, scalar_prefetch = 0 : i64, scratch_operands = 0 : i64, tpu.core_type = #tpu.core_type<tc>, window_params = [{transform_indices = @transform_0, window_bounds = array<i64: 8, 512>}, {pipeline_mode = #tpu.pipeline_mode<synchronous>, transform_indices = @transform_1, window_bounds = array<i64: 9, 1, 512>}, {pipeline_mode = #tpu.pipeline_mode<synchronous>, transform_indices = @transform_2, window_bounds = array<i64: 8, 72>}, {pipeline_mode = #tpu.pipeline_mode<synchronous>, transform_indices = @transform_3, window_bounds = array<i64: 21, 1>}, {pipeline_mode = #tpu.pipeline_mode<synchronous>, transform_indices = @transform_4, window_bounds = array<i64: 2, 8>}, {pipeline_mode = #tpu.pipeline_mode<synchronous>, transform_indices = @transform_5, window_bounds = array<i64: 512, 2>}, {pipeline_mode = #tpu.pipeline_mode<synchronous>, transform_indices = @transform_6, window_bounds = array<i64: 2, 512>}, {transform_indices = @transform_7, window_bounds = array<i64: 3>}, {transform_indices = @transform_8, window_bounds = array<i64: 4, 512>}, {transform_indices = @transform_9, window_bounds = array<i64: 1, 2, 2>}]} {
    %c0 = arith.constant 0 : index
    %c0_0 = arith.constant 0 : index
    %0 = vector.load %arg1[%c0, %c0_0] : memref<8x512xf32, #tpu.memory_space<vmem>>, vector<8x512xf32>
    %c0_1 = arith.constant 0 : index
    %c0_2 = arith.constant 0 : index
    %1 = vector.load %arg3[%c0_1, %c0_2] : memref<8x72xf32, #tpu.memory_space<vmem>>, vector<8x72xf32>
    %c0_3 = arith.constant 0 : index
    %c0_4 = arith.constant 0 : index
    %2 = vector.load %arg4[%c0_3, %c0_4] : memref<21x1xf32, #tpu.memory_space<vmem>>, vector<21x1xf32>
    %3 = vector.extract_strided_slice %2 {offsets = [0, 0], sizes = [2, 1], strides = [1, 1]} : vector<21x1xf32> to vector<2x1xf32>
    %4 = vector.extract_strided_slice %2 {offsets = [2, 0], sizes = [2, 1], strides = [1, 1]} : vector<21x1xf32> to vector<2x1xf32>
    %5 = vector.extract_strided_slice %2 {offsets = [4, 0], sizes = [2, 1], strides = [1, 1]} : vector<21x1xf32> to vector<2x1xf32>
    %6 = vector.extract_strided_slice %2 {offsets = [6, 0], sizes = [1, 1], strides = [1, 1]} : vector<21x1xf32> to vector<1x1xf32>
    %7 = vector.extract_strided_slice %2 {offsets = [7, 0], sizes = [4, 1], strides = [1, 1]} : vector<21x1xf32> to vector<4x1xf32>
    %8 = vector.extract_strided_slice %2 {offsets = [11, 0], sizes = [4, 1], strides = [1, 1]} : vector<21x1xf32> to vector<4x1xf32>
    %9 = vector.extract_strided_slice %2 {offsets = [15, 0], sizes = [1, 1], strides = [1, 1]} : vector<21x1xf32> to vector<1x1xf32>
    %10 = vector.extract_strided_slice %2 {offsets = [16, 0], sizes = [2, 1], strides = [1, 1]} : vector<21x1xf32> to vector<2x1xf32>
    %11 = vector.extract_strided_slice %2 {offsets = [18, 0], sizes = [2, 1], strides = [1, 1]} : vector<21x1xf32> to vector<2x1xf32>
    %12 = vector.extract_strided_slice %2 {offsets = [20, 0], sizes = [1, 1], strides = [1, 1]} : vector<21x1xf32> to vector<1x1xf32>
    %13 = vector.extract_strided_slice %1 {offsets = [0, 0], sizes = [2, 72], strides = [1, 1]} : vector<8x72xf32> to vector<2x72xf32>
    %c17_i32 = arith.constant 17 : i32
    %14 = tpu.dynamic_rotate %0 by %c17_i32 dim 1 : vector<8x512xf32>, i32 -> vector<8x512xf32>
    %c0_5 = arith.constant 0 : index
    %c0_6 = arith.constant 0 : index
    %c0_7 = arith.constant 0 : index
    %15 = vector.load %arg2[%c0_5, %c0_6, %c0_7] : memref<9x1x512xf32, #tpu.memory_space<vmem>>, vector<1x1x512xf32>
    %16 = vector.shape_cast %15 : vector<1x1x512xf32> to vector<1x512xf32>
    %17 = vector.broadcast %16 : vector<1x512xf32> to vector<8x512xf32>
    %18 = arith.mulf %14, %17 : vector<8x512xf32>
    %c16_i32 = arith.constant 16 : i32
    %19 = tpu.dynamic_rotate %0 by %c16_i32 dim 1 : vector<8x512xf32>, i32 -> vector<8x512xf32>
    %c1 = arith.constant 1 : index
    %c0_8 = arith.constant 0 : index
    %c0_9 = arith.constant 0 : index
    %20 = vector.load %arg2[%c1, %c0_8, %c0_9] : memref<9x1x512xf32, #tpu.memory_space<vmem>>, vector<1x1x512xf32>
    %21 = vector.shape_cast %20 : vector<1x1x512xf32> to vector<1x512xf32>
    %22 = vector.broadcast %21 : vector<1x512xf32> to vector<8x512xf32>
    %23 = arith.mulf %19, %22 : vector<8x512xf32>
    %c15_i32 = arith.constant 15 : i32
    %24 = tpu.dynamic_rotate %0 by %c15_i32 dim 1 : vector<8x512xf32>, i32 -> vector<8x512xf32>
    %c2 = arith.constant 2 : index
    %c0_10 = arith.constant 0 : index
    %c0_11 = arith.constant 0 : index
    %25 = vector.load %arg2[%c2, %c0_10, %c0_11] : memref<9x1x512xf32, #tpu.memory_space<vmem>>, vector<1x1x512xf32>
    %26 = vector.shape_cast %25 : vector<1x1x512xf32> to vector<1x512xf32>
    %27 = vector.broadcast %26 : vector<1x512xf32> to vector<8x512xf32>
    %28 = arith.mulf %24, %27 : vector<8x512xf32>
    %c1_i32 = arith.constant 1 : i32
    %29 = tpu.dynamic_rotate %0 by %c1_i32 dim 1 : vector<8x512xf32>, i32 -> vector<8x512xf32>
    %c3 = arith.constant 3 : index
    %c0_12 = arith.constant 0 : index
    %c0_13 = arith.constant 0 : index
    %30 = vector.load %arg2[%c3, %c0_12, %c0_13] : memref<9x1x512xf32, #tpu.memory_space<vmem>>, vector<1x1x512xf32>
    %31 = vector.shape_cast %30 : vector<1x1x512xf32> to vector<1x512xf32>
    %32 = vector.broadcast %31 : vector<1x512xf32> to vector<8x512xf32>
    %33 = arith.mulf %29, %32 : vector<8x512xf32>
    %c511_i32 = arith.constant 511 : i32
    %34 = tpu.dynamic_rotate %0 by %c511_i32 dim 1 : vector<8x512xf32>, i32 -> vector<8x512xf32>
    %c5 = arith.constant 5 : index
    %c0_14 = arith.constant 0 : index
    %c0_15 = arith.constant 0 : index
    %35 = vector.load %arg2[%c5, %c0_14, %c0_15] : memref<9x1x512xf32, #tpu.memory_space<vmem>>, vector<1x1x512xf32>
    %36 = vector.shape_cast %35 : vector<1x1x512xf32> to vector<1x512xf32>
    %37 = vector.broadcast %36 : vector<1x512xf32> to vector<8x512xf32>
    %38 = arith.mulf %34, %37 : vector<8x512xf32>
    %c497_i32 = arith.constant 497 : i32
    %39 = tpu.dynamic_rotate %0 by %c497_i32 dim 1 : vector<8x512xf32>, i32 -> vector<8x512xf32>
    %c6 = arith.constant 6 : index
    %c0_16 = arith.constant 0 : index
    %c0_17 = arith.constant 0 : index
    %40 = vector.load %arg2[%c6, %c0_16, %c0_17] : memref<9x1x512xf32, #tpu.memory_space<vmem>>, vector<1x1x512xf32>
    %41 = vector.shape_cast %40 : vector<1x1x512xf32> to vector<1x512xf32>
    %42 = vector.broadcast %41 : vector<1x512xf32> to vector<8x512xf32>
    %43 = arith.mulf %39, %42 : vector<8x512xf32>
    %c496_i32 = arith.constant 496 : i32
    %44 = tpu.dynamic_rotate %0 by %c496_i32 dim 1 : vector<8x512xf32>, i32 -> vector<8x512xf32>
    %c7 = arith.constant 7 : index
    %c0_18 = arith.constant 0 : index
    %c0_19 = arith.constant 0 : index
    %45 = vector.load %arg2[%c7, %c0_18, %c0_19] : memref<9x1x512xf32, #tpu.memory_space<vmem>>, vector<1x1x512xf32>
    %46 = vector.shape_cast %45 : vector<1x1x512xf32> to vector<1x512xf32>
    %47 = vector.broadcast %46 : vector<1x512xf32> to vector<8x512xf32>
    %48 = arith.mulf %44, %47 : vector<8x512xf32>
    %c495_i32 = arith.constant 495 : i32
    %49 = tpu.dynamic_rotate %0 by %c495_i32 dim 1 : vector<8x512xf32>, i32 -> vector<8x512xf32>
    %c8 = arith.constant 8 : index
    %c0_20 = arith.constant 0 : index
    %c0_21 = arith.constant 0 : index
    %50 = vector.load %arg2[%c8, %c0_20, %c0_21] : memref<9x1x512xf32, #tpu.memory_space<vmem>>, vector<1x1x512xf32>
    %51 = vector.shape_cast %50 : vector<1x1x512xf32> to vector<1x512xf32>
    %52 = vector.broadcast %51 : vector<1x512xf32> to vector<8x512xf32>
    %53 = arith.mulf %49, %52 : vector<8x512xf32>
    %54 = tpu.concatenate %18, %23, %28, %33, %0, %38, %43, %48, %53 in 0 : vector<8x512xf32>, vector<8x512xf32>, vector<8x512xf32>, vector<8x512xf32>, vector<8x512xf32>, vector<8x512xf32>, vector<8x512xf32>, vector<8x512xf32>, vector<8x512xf32> -> vector<72x512xf32>
    %cst = arith.constant dense<0.000000e+00> : vector<2x512xf32>
    %55 = tpu.matmul %13, %54, %cst {dimension_numbers = #tpu.dot_dimension_numbers<[1], [0], [0], [1], [0, 0, 1, 1], [], []>} : vector<2x72xf32>, vector<72x512xf32>, vector<2x512xf32> -> vector<2x512xf32>
    %56 = vector.broadcast %3 : vector<2x1xf32> to vector<2x512xf32>
    %57 = arith.addf %55, %56 : vector<2x512xf32>
    %cst_22 = arith.constant 0.000000e+00 : f32
    %58 = vector.broadcast %cst_22 : f32 to vector<2x512xf32>
    %59 = arith.maximumf %57, %58 : vector<2x512xf32>
    %60 = vector.extract_strided_slice %1 {offsets = [2, 0], sizes = [2, 18], strides = [1, 1]} : vector<8x72xf32> to vector<2x18xf32>
    %c17_i32_23 = arith.constant 17 : i32
    %61 = tpu.dynamic_rotate %59 by %c17_i32_23 dim 1 : vector<2x512xf32>, i32 -> vector<2x512xf32>
    %c0_24 = arith.constant 0 : index
    %c0_25 = arith.constant 0 : index
    %c0_26 = arith.constant 0 : index
    %62 = vector.load %arg2[%c0_24, %c0_25, %c0_26] : memref<9x1x512xf32, #tpu.memory_space<vmem>>, vector<1x1x512xf32>
    %63 = vector.shape_cast %62 : vector<1x1x512xf32> to vector<1x512xf32>
    %64 = vector.broadcast %63 : vector<1x512xf32> to vector<2x512xf32>
    %65 = arith.mulf %61, %64 : vector<2x512xf32>
    %c16_i32_27 = arith.constant 16 : i32
    %66 = tpu.dynamic_rotate %59 by %c16_i32_27 dim 1 : vector<2x512xf32>, i32 -> vector<2x512xf32>
    %c1_28 = arith.constant 1 : index
    %c0_29 = arith.constant 0 : index
    %c0_30 = arith.constant 0 : index
    %67 = vector.load %arg2[%c1_28, %c0_29, %c0_30] : memref<9x1x512xf32, #tpu.memory_space<vmem>>, vector<1x1x512xf32>
    %68 = vector.shape_cast %67 : vector<1x1x512xf32> to vector<1x512xf32>
    %69 = vector.broadcast %68 : vector<1x512xf32> to vector<2x512xf32>
    %70 = arith.mulf %66, %69 : vector<2x512xf32>
    %c15_i32_31 = arith.constant 15 : i32
    %71 = tpu.dynamic_rotate %59 by %c15_i32_31 dim 1 : vector<2x512xf32>, i32 -> vector<2x512xf32>
    %c2_32 = arith.constant 2 : index
    %c0_33 = arith.constant 0 : index
    %c0_34 = arith.constant 0 : index
    %72 = vector.load %arg2[%c2_32, %c0_33, %c0_34] : memref<9x1x512xf32, #tpu.memory_space<vmem>>, vector<1x1x512xf32>
    %73 = vector.shape_cast %72 : vector<1x1x512xf32> to vector<1x512xf32>
    %74 = vector.broadcast %73 : vector<1x512xf32> to vector<2x512xf32>
    %75 = arith.mulf %71, %74 : vector<2x512xf32>
    %c1_i32_35 = arith.constant 1 : i32
    %76 = tpu.dynamic_rotate %59 by %c1_i32_35 dim 1 : vector<2x512xf32>, i32 -> vector<2x512xf32>
    %c3_36 = arith.constant 3 : index
    %c0_37 = arith.constant 0 : index
    %c0_38 = arith.constant 0 : index
    %77 = vector.load %arg2[%c3_36, %c0_37, %c0_38] : memref<9x1x512xf32, #tpu.memory_space<vmem>>, vector<1x1x512xf32>
    %78 = vector.shape_cast %77 : vector<1x1x512xf32> to vector<1x512xf32>
    %79 = vector.broadcast %78 : vector<1x512xf32> to vector<2x512xf32>
    %80 = arith.mulf %76, %79 : vector<2x512xf32>
    %c511_i32_39 = arith.constant 511 : i32
    %81 = tpu.dynamic_rotate %59 by %c511_i32_39 dim 1 : vector<2x512xf32>, i32 -> vector<2x512xf32>
    %c5_40 = arith.constant 5 : index
    %c0_41 = arith.constant 0 : index
    %c0_42 = arith.constant 0 : index
    %82 = vector.load %arg2[%c5_40, %c0_41, %c0_42] : memref<9x1x512xf32, #tpu.memory_space<vmem>>, vector<1x1x512xf32>
    %83 = vector.shape_cast %82 : vector<1x1x512xf32> to vector<1x512xf32>
    %84 = vector.broadcast %83 : vector<1x512xf32> to vector<2x512xf32>
    %85 = arith.mulf %81, %84 : vector<2x512xf32>
    %c497_i32_43 = arith.constant 497 : i32
    %86 = tpu.dynamic_rotate %59 by %c497_i32_43 dim 1 : vector<2x512xf32>, i32 -> vector<2x512xf32>
    %c6_44 = arith.constant 6 : index
    %c0_45 = arith.constant 0 : index
    %c0_46 = arith.constant 0 : index
    %87 = vector.load %arg2[%c6_44, %c0_45, %c0_46] : memref<9x1x512xf32, #tpu.memory_space<vmem>>, vector<1x1x512xf32>
    %88 = vector.shape_cast %87 : vector<1x1x512xf32> to vector<1x512xf32>
    %89 = vector.broadcast %88 : vector<1x512xf32> to vector<2x512xf32>
    %90 = arith.mulf %86, %89 : vector<2x512xf32>
    %c496_i32_47 = arith.constant 496 : i32
    %91 = tpu.dynamic_rotate %59 by %c496_i32_47 dim 1 : vector<2x512xf32>, i32 -> vector<2x512xf32>
    %c7_48 = arith.constant 7 : index
    %c0_49 = arith.constant 0 : index
    %c0_50 = arith.constant 0 : index
    %92 = vector.load %arg2[%c7_48, %c0_49, %c0_50] : memref<9x1x512xf32, #tpu.memory_space<vmem>>, vector<1x1x512xf32>
    %93 = vector.shape_cast %92 : vector<1x1x512xf32> to vector<1x512xf32>
    %94 = vector.broadcast %93 : vector<1x512xf32> to vector<2x512xf32>
    %95 = arith.mulf %91, %94 : vector<2x512xf32>
    %c495_i32_51 = arith.constant 495 : i32
    %96 = tpu.dynamic_rotate %59 by %c495_i32_51 dim 1 : vector<2x512xf32>, i32 -> vector<2x512xf32>
    %c8_52 = arith.constant 8 : index
    %c0_53 = arith.constant 0 : index
    %c0_54 = arith.constant 0 : index
    %97 = vector.load %arg2[%c8_52, %c0_53, %c0_54] : memref<9x1x512xf32, #tpu.memory_space<vmem>>, vector<1x1x512xf32>
    %98 = vector.shape_cast %97 : vector<1x1x512xf32> to vector<1x512xf32>
    %99 = vector.broadcast %98 : vector<1x512xf32> to vector<2x512xf32>
    %100 = arith.mulf %96, %99 : vector<2x512xf32>
    %101 = tpu.concatenate %65, %70, %75, %80, %59, %85, %90, %95, %100 in 0 : vector<2x512xf32>, vector<2x512xf32>, vector<2x512xf32>, vector<2x512xf32>, vector<2x512xf32>, vector<2x512xf32>, vector<2x512xf32>, vector<2x512xf32>, vector<2x512xf32> -> vector<18x512xf32>
    %cst_55 = arith.constant dense<0.000000e+00> : vector<2x512xf32>
    %102 = tpu.matmul %60, %101, %cst_55 {dimension_numbers = #tpu.dot_dimension_numbers<[1], [0], [0], [1], [0, 0, 1, 1], [], []>} : vector<2x18xf32>, vector<18x512xf32>, vector<2x512xf32> -> vector<2x512xf32>
    %103 = vector.broadcast %4 : vector<2x1xf32> to vector<2x512xf32>
    %104 = arith.addf %102, %103 : vector<2x512xf32>
    %cst_56 = arith.constant 0.000000e+00 : f32
    %105 = vector.broadcast %cst_56 : f32 to vector<2x512xf32>
    %106 = arith.maximumf %104, %105 : vector<2x512xf32>
    %107 = vector.broadcast %5 : vector<2x1xf32> to vector<2x512xf32>
    %108 = arith.mulf %107, %106 : vector<2x512xf32>
    %cst_57 = arith.constant dense<0.000000e+00> : vector<512xf32>
    %109 = vector.multi_reduction <add>, %108, %cst_57 [0] : vector<2x512xf32> to vector<512xf32>
    %110 = vector.shape_cast %109 : vector<512xf32> to vector<1x512xf32>
    %111 = vector.broadcast %6 : vector<1x1xf32> to vector<1x512xf32>
    %112 = arith.addf %110, %111 : vector<1x512xf32>
    %113 = arith.negf %112 : vector<1x512xf32>
    %114 = math.exp %113 : vector<1x512xf32>
    %cst_58 = arith.constant 1.000000e+00 : f32
    %115 = vector.broadcast %cst_58 : f32 to vector<1x512xf32>
    %116 = arith.addf %115, %114 : vector<1x512xf32>
    %117 = arith.divf %115, %116 : vector<1x512xf32>
    %cst_59 = arith.constant 1.000000e+00 : f32
    %118 = vector.broadcast %cst_59 : f32 to vector<1x512xf32>
    %119 = arith.addf %117, %118 : vector<1x512xf32>
    %120 = vector.broadcast %119 : vector<1x512xf32> to vector<8x512xf32>
    %121 = arith.mulf %0, %120 : vector<8x512xf32>
    %c0_60 = arith.constant 0 : index
    %c0_61 = arith.constant 0 : index
    %122 = vector.load %arg6[%c0_60, %c0_61] : memref<512x2xf32, #tpu.memory_space<vmem>>, vector<512x2xf32>
    %cst_62 = arith.constant dense<0.000000e+00> : vector<8x2xf32>
    %123 = tpu.matmul %121, %122, %cst_62 {dimension_numbers = #tpu.dot_dimension_numbers<[1], [0], [0], [1], [0, 0, 1, 1], [], []>} : vector<8x512xf32>, vector<512x2xf32>, vector<8x2xf32> -> vector<8x2xf32>
    %c0_63 = arith.constant 0 : index
    %c0_64 = arith.constant 0 : index
    %124 = vector.load %arg5[%c0_63, %c0_64] : memref<2x8xf32, #tpu.memory_space<vmem>>, vector<2x8xf32>
    %cst_65 = arith.constant dense<0.000000e+00> : vector<2x2xf32>
    %125 = tpu.matmul %124, %123, %cst_65 {dimension_numbers = #tpu.dot_dimension_numbers<[1], [0], [0], [1], [0, 0, 1, 1], [], []>} : vector<2x8xf32>, vector<8x2xf32>, vector<2x2xf32> -> vector<2x2xf32>
    %126 = vector.broadcast %10 : vector<2x1xf32> to vector<2x2xf32>
    %127 = arith.addf %125, %126 : vector<2x2xf32>
    %cst_66 = arith.constant 0.000000e+00 : f32
    %128 = vector.broadcast %cst_66 : f32 to vector<2x2xf32>
    %129 = arith.maximumf %127, %128 : vector<2x2xf32>
    %130 = vector.broadcast %11 : vector<2x1xf32> to vector<2x2xf32>
    %131 = arith.mulf %130, %129 : vector<2x2xf32>
    %cst_67 = arith.constant dense<0.000000e+00> : vector<2xf32>
    %132 = vector.multi_reduction <add>, %131, %cst_67 [0] : vector<2x2xf32> to vector<2xf32>
    %133 = vector.shape_cast %132 : vector<2xf32> to vector<1x2xf32>
    %134 = vector.broadcast %12 : vector<1x1xf32> to vector<1x2xf32>
    %135 = arith.addf %133, %134 : vector<1x2xf32>
    %136 = arith.negf %135 : vector<1x2xf32>
    %137 = math.exp %136 : vector<1x2xf32>
    %cst_68 = arith.constant 1.000000e+00 : f32
    %138 = vector.broadcast %cst_68 : f32 to vector<1x2xf32>
    %139 = arith.addf %138, %137 : vector<1x2xf32>
    %140 = arith.divf %138, %139 : vector<1x2xf32>
    %c0_69 = arith.constant 0 : index
    %141 = memref.load %arg8[%c0_69] : memref<3xf32, #tpu.memory_space<smem>>
    %c1_70 = arith.constant 1 : index
    %142 = memref.load %arg8[%c1_70] : memref<3xf32, #tpu.memory_space<smem>>
    %c2_71 = arith.constant 2 : index
    %143 = memref.load %arg8[%c2_71] : memref<3xf32, #tpu.memory_space<smem>>
    %cst_72 = arith.constant 5.000000e-01 : f32
    %144 = vector.broadcast %cst_72 : f32 to vector<1x2xf32>
    %145 = arith.subf %140, %144 : vector<1x2xf32>
    %146 = vector.broadcast %142 : f32 to vector<1x2xf32>
    %147 = arith.mulf %145, %146 : vector<1x2xf32>
    %148 = vector.broadcast %141 : f32 to vector<1x2xf32>
    %149 = arith.addf %148, %147 : vector<1x2xf32>
    %cst_73 = arith.constant 1.000000e-01 : f32
    %cst_74 = arith.constant 0.899999976 : f32
    %150 = vector.broadcast %cst_73 : f32 to vector<1x2xf32>
    %151 = arith.maximumf %150, %149 : vector<1x2xf32>
    %152 = vector.broadcast %cst_74 : f32 to vector<1x2xf32>
    %153 = arith.minimumf %152, %151 : vector<1x2xf32>
    %154 = vector.extract_strided_slice %153 {offsets = [0, 0], sizes = [1, 1], strides = [1, 1]} : vector<1x2xf32> to vector<1x1xf32>
    %c0_75 = arith.constant 0 : index
    %c0_76 = arith.constant 0 : index
    %155 = vector.load %arg7[%c0_75, %c0_76] : memref<2x512xf32, #tpu.memory_space<vmem>>, vector<1x512xf32>
    %156 = vector.broadcast %154 : vector<1x1xf32> to vector<1x512xf32>
    %157 = arith.mulf %156, %155 : vector<1x512xf32>
    %158 = vector.extract_strided_slice %153 {offsets = [0, 1], sizes = [1, 1], strides = [1, 1]} : vector<1x2xf32> to vector<1x1xf32>
    %c1_77 = arith.constant 1 : index
    %c0_78 = arith.constant 0 : index
    %159 = vector.load %arg7[%c1_77, %c0_78] : memref<2x512xf32, #tpu.memory_space<vmem>>, vector<1x512xf32>
    %160 = vector.broadcast %158 : vector<1x1xf32> to vector<1x512xf32>
    %161 = arith.mulf %160, %159 : vector<1x512xf32>
    %162 = arith.addf %157, %161 : vector<1x512xf32>
    %163 = vector.extract_strided_slice %1 {offsets = [4, 0], sizes = [4, 72], strides = [1, 1]} : vector<8x72xf32> to vector<4x72xf32>
    %c17_i32_79 = arith.constant 17 : i32
    %164 = tpu.dynamic_rotate %121 by %c17_i32_79 dim 1 : vector<8x512xf32>, i32 -> vector<8x512xf32>
    %c0_80 = arith.constant 0 : index
    %c0_81 = arith.constant 0 : index
    %c0_82 = arith.constant 0 : index
    %165 = vector.load %arg2[%c0_80, %c0_81, %c0_82] : memref<9x1x512xf32, #tpu.memory_space<vmem>>, vector<1x1x512xf32>
    %166 = vector.shape_cast %165 : vector<1x1x512xf32> to vector<1x512xf32>
    %167 = vector.broadcast %166 : vector<1x512xf32> to vector<8x512xf32>
    %168 = arith.mulf %164, %167 : vector<8x512xf32>
    %c16_i32_83 = arith.constant 16 : i32
    %169 = tpu.dynamic_rotate %121 by %c16_i32_83 dim 1 : vector<8x512xf32>, i32 -> vector<8x512xf32>
    %c1_84 = arith.constant 1 : index
    %c0_85 = arith.constant 0 : index
    %c0_86 = arith.constant 0 : index
    %170 = vector.load %arg2[%c1_84, %c0_85, %c0_86] : memref<9x1x512xf32, #tpu.memory_space<vmem>>, vector<1x1x512xf32>
    %171 = vector.shape_cast %170 : vector<1x1x512xf32> to vector<1x512xf32>
    %172 = vector.broadcast %171 : vector<1x512xf32> to vector<8x512xf32>
    %173 = arith.mulf %169, %172 : vector<8x512xf32>
    %c15_i32_87 = arith.constant 15 : i32
    %174 = tpu.dynamic_rotate %121 by %c15_i32_87 dim 1 : vector<8x512xf32>, i32 -> vector<8x512xf32>
    %c2_88 = arith.constant 2 : index
    %c0_89 = arith.constant 0 : index
    %c0_90 = arith.constant 0 : index
    %175 = vector.load %arg2[%c2_88, %c0_89, %c0_90] : memref<9x1x512xf32, #tpu.memory_space<vmem>>, vector<1x1x512xf32>
    %176 = vector.shape_cast %175 : vector<1x1x512xf32> to vector<1x512xf32>
    %177 = vector.broadcast %176 : vector<1x512xf32> to vector<8x512xf32>
    %178 = arith.mulf %174, %177 : vector<8x512xf32>
    %c1_i32_91 = arith.constant 1 : i32
    %179 = tpu.dynamic_rotate %121 by %c1_i32_91 dim 1 : vector<8x512xf32>, i32 -> vector<8x512xf32>
    %c3_92 = arith.constant 3 : index
    %c0_93 = arith.constant 0 : index
    %c0_94 = arith.constant 0 : index
    %180 = vector.load %arg2[%c3_92, %c0_93, %c0_94] : memref<9x1x512xf32, #tpu.memory_space<vmem>>, vector<1x1x512xf32>
    %181 = vector.shape_cast %180 : vector<1x1x512xf32> to vector<1x512xf32>
    %182 = vector.broadcast %181 : vector<1x512xf32> to vector<8x512xf32>
    %183 = arith.mulf %179, %182 : vector<8x512xf32>
    %c511_i32_95 = arith.constant 511 : i32
    %184 = tpu.dynamic_rotate %121 by %c511_i32_95 dim 1 : vector<8x512xf32>, i32 -> vector<8x512xf32>
    %c5_96 = arith.constant 5 : index
    %c0_97 = arith.constant 0 : index
    %c0_98 = arith.constant 0 : index
    %185 = vector.load %arg2[%c5_96, %c0_97, %c0_98] : memref<9x1x512xf32, #tpu.memory_space<vmem>>, vector<1x1x512xf32>
    %186 = vector.shape_cast %185 : vector<1x1x512xf32> to vector<1x512xf32>
    %187 = vector.broadcast %186 : vector<1x512xf32> to vector<8x512xf32>
    %188 = arith.mulf %184, %187 : vector<8x512xf32>
    %c497_i32_99 = arith.constant 497 : i32
    %189 = tpu.dynamic_rotate %121 by %c497_i32_99 dim 1 : vector<8x512xf32>, i32 -> vector<8x512xf32>
    %c6_100 = arith.constant 6 : index
    %c0_101 = arith.constant 0 : index
    %c0_102 = arith.constant 0 : index
    %190 = vector.load %arg2[%c6_100, %c0_101, %c0_102] : memref<9x1x512xf32, #tpu.memory_space<vmem>>, vector<1x1x512xf32>
    %191 = vector.shape_cast %190 : vector<1x1x512xf32> to vector<1x512xf32>
    %192 = vector.broadcast %191 : vector<1x512xf32> to vector<8x512xf32>
    %193 = arith.mulf %189, %192 : vector<8x512xf32>
    %c496_i32_103 = arith.constant 496 : i32
    %194 = tpu.dynamic_rotate %121 by %c496_i32_103 dim 1 : vector<8x512xf32>, i32 -> vector<8x512xf32>
    %c7_104 = arith.constant 7 : index
    %c0_105 = arith.constant 0 : index
    %c0_106 = arith.constant 0 : index
    %195 = vector.load %arg2[%c7_104, %c0_105, %c0_106] : memref<9x1x512xf32, #tpu.memory_space<vmem>>, vector<1x1x512xf32>
    %196 = vector.shape_cast %195 : vector<1x1x512xf32> to vector<1x512xf32>
    %197 = vector.broadcast %196 : vector<1x512xf32> to vector<8x512xf32>
    %198 = arith.mulf %194, %197 : vector<8x512xf32>
    %c495_i32_107 = arith.constant 495 : i32
    %199 = tpu.dynamic_rotate %121 by %c495_i32_107 dim 1 : vector<8x512xf32>, i32 -> vector<8x512xf32>
    %c8_108 = arith.constant 8 : index
    %c0_109 = arith.constant 0 : index
    %c0_110 = arith.constant 0 : index
    %200 = vector.load %arg2[%c8_108, %c0_109, %c0_110] : memref<9x1x512xf32, #tpu.memory_space<vmem>>, vector<1x1x512xf32>
    %201 = vector.shape_cast %200 : vector<1x1x512xf32> to vector<1x512xf32>
    %202 = vector.broadcast %201 : vector<1x512xf32> to vector<8x512xf32>
    %203 = arith.mulf %199, %202 : vector<8x512xf32>
    %204 = tpu.concatenate %168, %173, %178, %183, %121, %188, %193, %198, %203 in 0 : vector<8x512xf32>, vector<8x512xf32>, vector<8x512xf32>, vector<8x512xf32>, vector<8x512xf32>, vector<8x512xf32>, vector<8x512xf32>, vector<8x512xf32>, vector<8x512xf32> -> vector<72x512xf32>
    %cst_111 = arith.constant dense<0.000000e+00> : vector<4x512xf32>
    %205 = tpu.matmul %163, %204, %cst_111 {dimension_numbers = #tpu.dot_dimension_numbers<[1], [0], [0], [1], [0, 0, 1, 1], [], []>} : vector<4x72xf32>, vector<72x512xf32>, vector<4x512xf32> -> vector<4x512xf32>
    %206 = vector.broadcast %7 : vector<4x1xf32> to vector<4x512xf32>
    %207 = arith.addf %205, %206 : vector<4x512xf32>
    %cst_112 = arith.constant 0.000000e+00 : f32
    %208 = vector.broadcast %cst_112 : f32 to vector<4x512xf32>
    %209 = arith.maximumf %207, %208 : vector<4x512xf32>
    %210 = vector.broadcast %8 : vector<4x1xf32> to vector<4x512xf32>
    %211 = arith.mulf %210, %209 : vector<4x512xf32>
    %cst_113 = arith.constant dense<0.000000e+00> : vector<512xf32>
    %212 = vector.multi_reduction <add>, %211, %cst_113 [0] : vector<4x512xf32> to vector<512xf32>
    %213 = vector.shape_cast %212 : vector<512xf32> to vector<1x512xf32>
    %214 = vector.broadcast %9 : vector<1x1xf32> to vector<1x512xf32>
    %215 = arith.addf %213, %214 : vector<1x512xf32>
    %216 = arith.negf %215 : vector<1x512xf32>
    %217 = math.exp %216 : vector<1x512xf32>
    %cst_114 = arith.constant 1.000000e+00 : f32
    %218 = vector.broadcast %cst_114 : f32 to vector<1x512xf32>
    %219 = arith.addf %218, %217 : vector<1x512xf32>
    %220 = arith.divf %218, %219 : vector<1x512xf32>
    %221 = arith.cmpf one, %220, %220 : vector<1x512xf32>
    %cst_115 = arith.constant 0.000000e+00 : f32
    %222 = vector.broadcast %cst_115 : f32 to vector<1x512xf32>
    %223 = arith.select %221, %222, %220 : vector<1x512xi1>, vector<1x512xf32>
    %224 = arith.subf %223, %162 : vector<1x512xf32>
    %cst_116 = arith.constant 9.99999997E-7 : f32
    %225 = vector.broadcast %cst_116 : f32 to vector<1x512xf32>
    %226 = arith.addf %224, %225 : vector<1x512xf32>
    %227 = vector.broadcast %143 : f32 to vector<1x512xf32>
    %228 = arith.mulf %226, %227 : vector<1x512xf32>
    %229 = arith.negf %228 : vector<1x512xf32>
    %230 = math.exp %229 : vector<1x512xf32>
    %cst_117 = arith.constant 1.000000e+00 : f32
    %231 = vector.broadcast %cst_117 : f32 to vector<1x512xf32>
    %232 = arith.addf %231, %230 : vector<1x512xf32>
    %233 = arith.divf %231, %232 : vector<1x512xf32>
    %234 = tpu.concatenate %215, %223, %233, %228 in 0 : vector<1x512xf32>, vector<1x512xf32>, vector<1x512xf32>, vector<1x512xf32> -> vector<4x512xf32>
    %c0_118 = arith.constant 0 : index
    %c0_119 = arith.constant 0 : index
    %235 = vector.load %arg9[%c0_118, %c0_119] : memref<4x512xf32, #tpu.memory_space<vmem>>, vector<4x512xf32>
    tpu.vector_store %arg9[%c0_118, %c0_119], %234 {strides = array<i32>} : memref<4x512xf32, #tpu.memory_space<vmem>>, vector<4x512xf32>,
    %236 = tpu.concatenate %153, %140 in 0 : vector<1x2xf32>, vector<1x2xf32> -> vector<2x2xf32>
    %c0_120 = arith.constant 0 : index
    %c0_121 = arith.constant 0 : index
    %c0_122 = arith.constant 0 : index
    %237 = vector.load %arg10[%c0_120, %c0_121, %c0_122] : memref<1x2x2xf32, #tpu.memory_space<vmem>>, vector<1x2x2xf32>
    %238 = vector.shape_cast %237 : vector<1x2x2xf32> to vector<2x2xf32>
    %239 = vector.shape_cast %236 : vector<2x2xf32> to vector<1x2x2xf32>
    tpu.vector_store %arg10[%c0_120, %c0_121, %c0_122], %239 {strides = array<i32>} : memref<1x2x2xf32, #tpu.memory_space<vmem>>, vector<1x2x2xf32>,
    return
  }
  func.func @transform_0(%arg0: i32) -> (i32, i32) {
    %c0_i32 = arith.constant 0 : i32
    %c0_i32_0 = arith.constant 0 : i32
    return %c0_i32, %arg0 : i32, i32
  }
  func.func @transform_1(%arg0: i32) -> (i32, i32, i32) {
    %c0_i32 = arith.constant 0 : i32
    %c0_i32_0 = arith.constant 0 : i32
    %c0_i32_1 = arith.constant 0 : i32
    %c0_i32_2 = arith.constant 0 : i32
    return %c0_i32, %c0_i32_0, %c0_i32_1 : i32, i32, i32
  }
  func.func @transform_2(%arg0: i32) -> (i32, i32) {
    %c0_i32 = arith.constant 0 : i32
    %c0_i32_0 = arith.constant 0 : i32
    %c0_i32_1 = arith.constant 0 : i32
    return %c0_i32, %c0_i32_0 : i32, i32
  }
  func.func @transform_3(%arg0: i32) -> (i32, i32) {
    %c0_i32 = arith.constant 0 : i32
    %c0_i32_0 = arith.constant 0 : i32
    %c0_i32_1 = arith.constant 0 : i32
    return %c0_i32, %c0_i32_0 : i32, i32
  }
  func.func @transform_4(%arg0: i32) -> (i32, i32) {
    %c0_i32 = arith.constant 0 : i32
    %c0_i32_0 = arith.constant 0 : i32
    %c0_i32_1 = arith.constant 0 : i32
    return %c0_i32, %c0_i32_0 : i32, i32
  }
  func.func @transform_5(%arg0: i32) -> (i32, i32) {
    %c0_i32 = arith.constant 0 : i32
    %c0_i32_0 = arith.constant 0 : i32
    %c0_i32_1 = arith.constant 0 : i32
    return %c0_i32, %c0_i32_0 : i32, i32
  }
  func.func @transform_6(%arg0: i32) -> (i32, i32) {
    %c0_i32 = arith.constant 0 : i32
    %c0_i32_0 = arith.constant 0 : i32
    %c0_i32_1 = arith.constant 0 : i32
    return %c0_i32, %c0_i32_0 : i32, i32
  }
  func.func @transform_7(%arg0: i32) -> i32 {
    %c0_i32 = arith.constant 0 : i32
    %c0_i32_0 = arith.constant 0 : i32
    return %c0_i32 : i32
  }
  func.func @transform_8(%arg0: i32) -> (i32, i32) {
    %c0_i32 = arith.constant 0 : i32
    %c0_i32_0 = arith.constant 0 : i32
    return %c0_i32, %arg0 : i32, i32
  }
  func.func @transform_9(%arg0: i32) -> (i32, i32, i32) {
    %c0_i32 = arith.constant 0 : i32
    %c0_i32_0 = arith.constant 0 : i32
    %c0_i32_1 = arith.constant 0 : i32
    return %arg0, %c0_i32, %c0_i32_0 : i32, i32, i32
  }
}

</mosaic_0001>

<llo_original>
// kernel: tpu_custom_call.1
$region0: #{tpu_custom_call.1}
  #allocation0 [shape = 'u32[]', space=smem, size = 0x4, offset = 0x4, fixed_abs, tag = 'smem constant byte address 0x4 - core index']
  #allocation1 [shape = 'u32[144,128]{1,0:T(1,128)}', space=vmem, size = 0x12000, scoped, tag = 'internal scratch']
  %s0 = inlined_call_operand.vmem [shape: f32[8,512], index: 0, kind: input, shape index: {}]
  %s1 = inlined_call_operand.vmem [shape: f32[9,1,512], index: 1, kind: input, shape index: {}]
  %s2 = inlined_call_operand.vmem [shape: f32[8,72], index: 2, kind: input, shape index: {}]
  %s3 = inlined_call_operand.vmem [shape: f32[21,1], index: 3, kind: input, shape index: {}]
  %s4 = inlined_call_operand.vmem [shape: f32[2,8], index: 4, kind: input, shape index: {}]
  %s5 = inlined_call_operand.vmem [shape: f32[512,2], index: 5, kind: input, shape index: {}]
  %s6 = inlined_call_operand.vmem [shape: f32[2,512], index: 6, kind: input, shape index: {}]
  %s7 = inlined_call_operand.vmem [shape: f32[3], index: 7, kind: input, shape index: {}]
  %s8 = inlined_call_operand.hbm [shape: f32[4,512], index: 8, kind: output, shape index: {0}]
  %s9 = inlined_call_operand.hbm [shape: f32[1,2,2], index: 9, kind: output, shape index: {1}]
  %10 = xla_tuple %s8, %s9
  %s11 = sld [smem:[#allocation0]]
  $region54: #{tpu_custom_call.1} parent=0
    _
  %s13 = ssub.s32 1, %s11
  %s14 = scalar_select 0, %s13, %s11
  $region1: #{tpu_custom_call.1} parent=0
    #allocation2 [shape = 'u8[512]{0}', space=smem, size = 0x200, scoped, tag = 'input window, operand 7, single buffered']
    #allocation3 [shape = 's32[1]{0}', space=sflag, size = 0x4, scoped, tag = 'scoped memory for tpu_custom_call.1']
    #allocation4 [shape = 's32[1]{0}', space=sflag, size = 0x4, scoped, tag = 'scoped memory for tpu_custom_call.1']
    #allocation5 [shape = 'u8[8192]{0}', space=vmem, size = 0x2000, scoped, tag = 'output window, operand 0, single buffered']
    #allocation6 [shape = 'u8[1024]{0}', space=vmem, size = 0x400, scoped, tag = 'output window, operand 1, single buffered']
    #allocation7 [shape = 's32[1]{0}', space=sflag, size = 0x4, scoped, tag = 'scoped memory for tpu_custom_call.1']
    %15 = vsyncpa [#allocation4], 0
    %16 = vsyncpa [#allocation3], 0
    %17 = vsyncpa [#allocation7], 0
    // Predicated region
    $region2: #{tpu_custom_call.1} parent=1 // pred_check
      _
    $region3: #{tpu_custom_call.1} parent=1 // pred_check_branch
      %19 = sbr.rel (0) target = $region5
    $region4: #{tpu_custom_call.1} parent=1 // pred_region
      _
    $region5: #{tpu_custom_call.1} parent=1 // pred_fallthru
      _
    // Predicated region
    $region6: #{tpu_custom_call.1} parent=1 // pred_check
      _
    $region7: #{tpu_custom_call.1} parent=1 // pred_check_branch
      %21 = sbr.rel (0) target = $region9
    $region8: #{tpu_custom_call.1} parent=1 // pred_region
      _
    $region9: #{tpu_custom_call.1} parent=1 // pred_fallthru
      _
    // Predicated region
    $region10: #{tpu_custom_call.1} parent=1 // pred_check
      _
    $region11: #{tpu_custom_call.1} parent=1 // pred_check_branch
      %23 = sbr.rel (0) target = $region13
    $region12: #{tpu_custom_call.1} parent=1 // pred_region
      _
    $region13: #{tpu_custom_call.1} parent=1 // pred_fallthru
      _
    // Predicated region
    $region14: #{tpu_custom_call.1} parent=1 // pred_check
      _
    $region15: #{tpu_custom_call.1} parent=1 // pred_check_branch
      %25 = sbr.rel (0) target = $region17
    $region16: #{tpu_custom_call.1} parent=1 // pred_region
      _
    $region17: #{tpu_custom_call.1} parent=1 // pred_fallthru
      _
    // Predicated region
    $region18: #{tpu_custom_call.1} parent=1 // pred_check
      _
    $region19: #{tpu_custom_call.1} parent=1 // pred_check_branch
      %27 = sbr.rel (0) target = $region21
    $region20: #{tpu_custom_call.1} parent=1 // pred_region
      _
    $region21: #{tpu_custom_call.1} parent=1 // pred_fallthru
      _
    // Predicated region
    $region22: #{tpu_custom_call.1} parent=1 // pred_check
      _
    $region23: #{tpu_custom_call.1} parent=1 // pred_check_branch
      %29 = sbr.rel (0) target = $region25
    $region24: #{tpu_custom_call.1} parent=1 // pred_region
      _
    $region25: #{tpu_custom_call.1} parent=1 // pred_fallthru
      _
    // Predicated region
    $region26: #{tpu_custom_call.1} parent=1 // pred_check
      _
    $region27: #{tpu_custom_call.1} parent=1 // pred_check_branch
      %31 = sbr.rel (0) target = $region29
    $region28: #{tpu_custom_call.1} parent=1 // pred_region
      _
    $region29: #{tpu_custom_call.1} parent=1 // pred_fallthru
      _
    // Predicated region
    $region30: #{tpu_custom_call.1} parent=1 // pred_check
      _
    $region31: #{tpu_custom_call.1} parent=1 // pred_check_branch
      %33 = sbr.rel (0) target = $region33
    $region32: #{tpu_custom_call.1} parent=1 // pred_region
      %s35 = ssub.s32 16, 16
      %36 = vsyncadd [#allocation4], %s35
      %s38 = sshll.u32 %s7, 4
      %s39 = int_to_ptr.vmem [resolvable:$true] %s38
      %41 = dma.vmem_to_smem %s39, 16, [#allocation2], [#allocation4]
    $region33: #{tpu_custom_call.1} parent=1 // pred_fallthru
      _
    // Predicated region
    $region34: #{tpu_custom_call.1} parent=1 // pred_check
      _
    $region35: #{tpu_custom_call.1} parent=1 // pred_check_branch
      %43 = sbr.rel (0) target = $region37
    $region36: #{tpu_custom_call.1} parent=1 // pred_region
      %44 = dma.done [#allocation4], 16
    $region37: #{tpu_custom_call.1} parent=1 // pred_fallthru
      _
    %45 = sfence
    %v46 = vld [vmem:[%s0] sm:$0xff]
    %v47 = vld [vmem:[%s0 + $0x8] sm:$0xff]
    %v48 = vld [vmem:[%s0 + $0x10] sm:$0xff]
    %v49 = vld [vmem:[%s0 + $0x18] sm:$0xff]
    %v50 = vld [vmem:[%s2] sm:$0xff]
    %v51 = vld [vmem:[%s3] sm:$0xff]
    %v52 = vld [vmem:[%s3 + $0x8] sm:$0xff]
    %v53 = vld [vmem:[%s3 + $0x10] sm:$0x1f]
    %54 = vrot.lane.b32.xlu0 %v46, 17
    %v55 = vpop.permute.xlu0 %54
    %56 = vrot.lane.b32.xlu0 %v47, 17
    %v57 = vpop.permute.xlu0 %56
    %58 = vrot.lane.b32.xlu0 %v48, 17
    %v59 = vpop.permute.xlu0 %58
    %60 = vrot.lane.b32.xlu0 %v49, 17
    %v61 = vpop.permute.xlu0 %60
    %v62 = vlaneseq
    %v63 = vand.u32 %v62, 127
    %vm64 = vcmp.lt.s32.totalorder %v63, 17
    %v65 = vsel %vm64, %v59, %v61
    %v66 = vsel %vm64, %v57, %v59
    %v67 = vsel %vm64, %v55, %v57
    %v68 = vsel %vm64, %v61, %v55
    %v69 = vld [vmem:[%s1] sm:$0xf]
    %v71 = vlaneseq
    %v72 = vshrl.u32 %v71, 7
    %v73 = vsub.s32 0, %v72
    %v74 = vrot.slane %v69, %v73
    %v75 = vlaneseq
    %v76 = vshrl.u32 %v75, 7
    %v77 = vsub.s32 1, %v76
    %v78 = vrot.slane %v69, %v77
    %v79 = vlaneseq
    %v80 = vshrl.u32 %v79, 7
    %v81 = vsub.s32 2, %v80
    %v82 = vrot.slane %v69, %v81
    %v83 = vlaneseq
    %v84 = vshrl.u32 %v83, 7
    %v85 = vsub.s32 3, %v84
    %v86 = vrot.slane %v69, %v85
    %v91 = vmul.f32 %v68, %v74
    %v92 = vmul.f32 %v67, %v78
    %v93 = vmul.f32 %v66, %v82
    %v94 = vmul.f32 %v65, %v86
    %95 = vrot.lane.b32.xlu0 %v46, 16
    %v96 = vpop.permute.xlu0 %95
    %97 = vrot.lane.b32.xlu0 %v47, 16
    %v98 = vpop.permute.xlu0 %97
    %99 = vrot.lane.b32.xlu0 %v48, 16
    %v100 = vpop.permute.xlu0 %99
    %101 = vrot.lane.b32.xlu0 %v49, 16
    %v102 = vpop.permute.xlu0 %101
    %vm103 = vcmp.lt.s32.totalorder %v63, 16
    %v104 = vsel %vm103, %v100, %v102
    %v105 = vsel %vm103, %v98, %v100
    %v106 = vsel %vm103, %v96, %v98
    %v107 = vsel %vm103, %v102, %v96
    %s108 = scalar_lea.vmem %s1, 4
    %v109 = vld [vmem:[%s108] sm:$0xf]
    %v111 = vlaneseq
    %v112 = vshrl.u32 %v111, 7
    %v113 = vsub.s32 0, %v112
    %v114 = vrot.slane %v109, %v113
    %v115 = vlaneseq
    %v116 = vshrl.u32 %v115, 7
    %v117 = vsub.s32 1, %v116
    %v118 = vrot.slane %v109, %v117
    %v119 = vlaneseq
    %v120 = vshrl.u32 %v119, 7
    %v121 = vsub.s32 2, %v120
    %v122 = vrot.slane %v109, %v121
    %v123 = vlaneseq
    %v124 = vshrl.u32 %v123, 7
    %v125 = vsub.s32 3, %v124
    %v126 = vrot.slane %v109, %v125
    %v131 = vmul.f32 %v107, %v114
    %v132 = vmul.f32 %v106, %v118
    %v133 = vmul.f32 %v105, %v122
    %v134 = vmul.f32 %v104, %v126
    %135 = vrot.lane.b32.xlu0 %v46, 15
    %v136 = vpop.permute.xlu0 %135
    %137 = vrot.lane.b32.xlu0 %v47, 15
    %v138 = vpop.permute.xlu0 %137
    %139 = vrot.lane.b32.xlu0 %v48, 15
    %v140 = vpop.permute.xlu0 %139
    %141 = vrot.lane.b32.xlu0 %v49, 15
    %v142 = vpop.permute.xlu0 %141
    %vm143 = vcmp.lt.s32.totalorder %v63, 15
    %v144 = vsel %vm143, %v140, %v142
    %v145 = vsel %vm143, %v138, %v140
    %v146 = vsel %vm143, %v136, %v138
    %v147 = vsel %vm143, %v142, %v136
    %s148 = scalar_lea.vmem %s1, 8
    %v149 = vld [vmem:[%s148] sm:$0xf]
    %v151 = vlaneseq
    %v152 = vshrl.u32 %v151, 7
    %v153 = vsub.s32 0, %v152
    %v154 = vrot.slane %v149, %v153
    %v155 = vlaneseq
    %v156 = vshrl.u32 %v155, 7
    %v157 = vsub.s32 1, %v156
    %v158 = vrot.slane %v149, %v157
    %v159 = vlaneseq
    %v160 = vshrl.u32 %v159, 7
    %v161 = vsub.s32 2, %v160
    %v162 = vrot.slane %v149, %v161
    %v163 = vlaneseq
    %v164 = vshrl.u32 %v163, 7
    %v165 = vsub.s32 3, %v164
    %v166 = vrot.slane %v149, %v165
    %v171 = vmul.f32 %v147, %v154
    %v172 = vmul.f32 %v146, %v158
    %v173 = vmul.f32 %v145, %v162
    %v174 = vmul.f32 %v144, %v166
    %175 = vrot.lane.b32.xlu0 %v46, 1
    %v176 = vpop.permute.xlu0 %175
    %177 = vrot.lane.b32.xlu0 %v47, 1
    %v178 = vpop.permute.xlu0 %177
    %179 = vrot.lane.b32.xlu0 %v48, 1
    %v180 = vpop.permute.xlu0 %179
    %181 = vrot.lane.b32.xlu0 %v49, 1
    %v182 = vpop.permute.xlu0 %181
    %vm183 = vcmp.lt.s32.totalorder %v63, 1
    %v184 = vsel %vm183, %v180, %v182
    %v185 = vsel %vm183, %v178, %v180
    %v186 = vsel %vm183, %v176, %v178
    %v187 = vsel %vm183, %v182, %v176
    %s188 = scalar_lea.vmem %s1, 12
    %v189 = vld [vmem:[%s188] sm:$0xf]
    %v191 = vlaneseq
    %v192 = vshrl.u32 %v191, 7
    %v193 = vsub.s32 0, %v192
    %v194 = vrot.slane %v189, %v193
    %v195 = vlaneseq
    %v196 = vshrl.u32 %v195, 7
    %v197 = vsub.s32 1, %v196
    %v198 = vrot.slane %v189, %v197
    %v199 = vlaneseq
    %v200 = vshrl.u32 %v199, 7
    %v201 = vsub.s32 2, %v200
    %v202 = vrot.slane %v189, %v201
    %v203 = vlaneseq
    %v204 = vshrl.u32 %v203, 7
    %v205 = vsub.s32 3, %v204
    %v206 = vrot.slane %v189, %v205
    %v211 = vmul.f32 %v187, %v194
    %v212 = vmul.f32 %v186, %v198
    %v213 = vmul.f32 %v185, %v202
    %v214 = vmul.f32 %v184, %v206
    %215 = vrot.lane.b32.xlu0 %v46, 127
    %v216 = vpop.permute.xlu0 %215
    %217 = vrot.lane.b32.xlu0 %v47, 127
    %v218 = vpop.permute.xlu0 %217
    %219 = vrot.lane.b32.xlu0 %v48, 127
    %v220 = vpop.permute.xlu0 %219
    %221 = vrot.lane.b32.xlu0 %v49, 127
    %v222 = vpop.permute.xlu0 %221
    %vm223 = vcmp.lt.s32.totalorder %v63, 127
    %v224 = vsel %vm223, %v220, %v222
    %v225 = vsel %vm223, %v218, %v220
    %v226 = vsel %vm223, %v216, %v218
    %v227 = vsel %vm223, %v222, %v216
    %s228 = scalar_lea.vmem %s1, 20
    %v229 = vld [vmem:[%s228] sm:$0xf]
    %v231 = vlaneseq
    %v232 = vshrl.u32 %v231, 7
    %v233 = vsub.s32 0, %v232
    %v234 = vrot.slane %v229, %v233
    %v235 = vlaneseq
    %v236 = vshrl.u32 %v235, 7
    %v237 = vsub.s32 1, %v236
    %v238 = vrot.slane %v229, %v237
    %v239 = vlaneseq
    %v240 = vshrl.u32 %v239, 7
    %v241 = vsub.s32 2, %v240
    %v242 = vrot.slane %v229, %v241
    %v243 = vlaneseq
    %v244 = vshrl.u32 %v243, 7
    %v245 = vsub.s32 3, %v244
    %v246 = vrot.slane %v229, %v245
    %v251 = vmul.f32 %v226, %v234
    %v252 = vmul.f32 %v225, %v238
    %v253 = vmul.f32 %v224, %v242
    %v254 = vmul.f32 %v227, %v246
    %255 = vrot.lane.b32.xlu0 %v46, 113
    %v256 = vpop.permute.xlu0 %255
    %257 = vrot.lane.b32.xlu0 %v47, 113
    %v258 = vpop.permute.xlu0 %257
    %259 = vrot.lane.b32.xlu0 %v48, 113
    %v260 = vpop.permute.xlu0 %259
    %261 = vrot.lane.b32.xlu0 %v49, 113
    %v262 = vpop.permute.xlu0 %261
    %vm263 = vcmp.lt.s32.totalorder %v63, 113
    %v264 = vsel %vm263, %v260, %v262
    %v265 = vsel %vm263, %v258, %v260
    %v266 = vsel %vm263, %v256, %v258
    %v267 = vsel %vm263, %v262, %v256
    %s268 = scalar_lea.vmem %s1, 24
    %v269 = vld [vmem:[%s268] sm:$0xf]
    %v271 = vlaneseq
    %v272 = vshrl.u32 %v271, 7
    %v273 = vsub.s32 0, %v272
    %v274 = vrot.slane %v269, %v273
    %v275 = vlaneseq
    %v276 = vshrl.u32 %v275, 7
    %v277 = vsub.s32 1, %v276
    %v278 = vrot.slane %v269, %v277
    %v279 = vlaneseq
    %v280 = vshrl.u32 %v279, 7
    %v281 = vsub.s32 2, %v280
    %v282 = vrot.slane %v269, %v281
    %v283 = vlaneseq
    %v284 = vshrl.u32 %v283, 7
    %v285 = vsub.s32 3, %v284
    %v286 = vrot.slane %v269, %v285
    %v291 = vmul.f32 %v266, %v274
    %v292 = vmul.f32 %v265, %v278
    %v293 = vmul.f32 %v264, %v282
    %v294 = vmul.f32 %v267, %v286
    %295 = vrot.lane.b32.xlu0 %v46, 112
    %v296 = vpop.permute.xlu0 %295
    %297 = vrot.lane.b32.xlu0 %v47, 112
    %v298 = vpop.permute.xlu0 %297
    %299 = vrot.lane.b32.xlu0 %v48, 112
    %v300 = vpop.permute.xlu0 %299
    %301 = vrot.lane.b32.xlu0 %v49, 112
    %v302 = vpop.permute.xlu0 %301
    %vm303 = vcmp.lt.s32.totalorder %v63, 112
    %v304 = vsel %vm303, %v300, %v302
    %v305 = vsel %vm303, %v298, %v300
    %v306 = vsel %vm303, %v296, %v298
    %v307 = vsel %vm303, %v302, %v296
    %s308 = scalar_lea.vmem %s1, 28
    %v309 = vld [vmem:[%s308] sm:$0xf]
    %v311 = vlaneseq
    %v312 = vshrl.u32 %v311, 7
    %v313 = vsub.s32 0, %v312
    %v314 = vrot.slane %v309, %v313
    %v315 = vlaneseq
    %v316 = vshrl.u32 %v315, 7
    %v317 = vsub.s32 1, %v316
    %v318 = vrot.slane %v309, %v317
    %v319 = vlaneseq
    %v320 = vshrl.u32 %v319, 7
    %v321 = vsub.s32 2, %v320
    %v322 = vrot.slane %v309, %v321
    %v323 = vlaneseq
    %v324 = vshrl.u32 %v323, 7
    %v325 = vsub.s32 3, %v324
    %v326 = vrot.slane %v309, %v325
    %v331 = vmul.f32 %v306, %v314
    %v332 = vmul.f32 %v305, %v318
    %v333 = vmul.f32 %v304, %v322
    %v334 = vmul.f32 %v307, %v326
    %335 = vrot.lane.b32.xlu0 %v46, 111
    %v336 = vpop.permute.xlu0 %335
    %337 = vrot.lane.b32.xlu0 %v47, 111
    %v338 = vpop.permute.xlu0 %337
    %339 = vrot.lane.b32.xlu0 %v48, 111
    %v340 = vpop.permute.xlu0 %339
    %341 = vrot.lane.b32.xlu0 %v49, 111
    %v342 = vpop.permute.xlu0 %341
    %vm343 = vcmp.lt.s32.totalorder %v63, 111
    %v344 = vsel %vm343, %v340, %v342
    %v345 = vsel %vm343, %v338, %v340
    %v346 = vsel %vm343, %v336, %v338
    %v347 = vsel %vm343, %v342, %v336
    %s348 = scalar_lea.vmem %s1, 32
    %v349 = vld [vmem:[%s348] sm:$0xf]
    %v351 = vlaneseq
    %v352 = vshrl.u32 %v351, 7
    %v353 = vsub.s32 0, %v352
    %v354 = vrot.slane %v349, %v353
    %v355 = vlaneseq
    %v356 = vshrl.u32 %v355, 7
    %v357 = vsub.s32 1, %v356
    %v358 = vrot.slane %v349, %v357
    %v359 = vlaneseq
    %v360 = vshrl.u32 %v359, 7
    %v361 = vsub.s32 2, %v360
    %v362 = vrot.slane %v349, %v361
    %v363 = vlaneseq
    %v364 = vshrl.u32 %v363, 7
    %v365 = vsub.s32 3, %v364
    %v366 = vrot.slane %v349, %v365
    %v371 = vmul.f32 %v346, %v354
    %v372 = vmul.f32 %v345, %v358
    %v373 = vmul.f32 %v344, %v362
    %v374 = vmul.f32 %v347, %v366
    %376 = vset.pattern.permute.xlu0 0
    %377 = vperm.xlu0 %376, %v51
    %v378 = vpop.permute.xlu0 %377
    %vm380 = vcmask 588800
    %v382 = vsel %vm380, %v50, 0
    %384 = vmatprep.subr.mxu0 %v92
    %385 = vmatpush1.msra.mxu0 %v91
    %386 = vmatprep.subr.mxu0 %v132
    %387 = vmatpush1.msra.mxu0 %v131
    %388 = vmatprep.subr.mxu0 %v172
    %389 = vmatpush1.msra.mxu0 %v171
    %390 = vmatprep.subr.mxu0 %v212
    %391 = vmatpush1.msra.mxu0 %v211
    %392 = vmatprep.subr.mxu0 %v47
    %393 = vmatpush1.msra.mxu0 %v46
    %394 = vmatprep.subr.mxu0 %v252
    %395 = vmatpush1.msra.mxu0 %v251
    %396 = vmatprep.subr.mxu0 %v292
    %397 = vmatpush1.msra.mxu0 %v291
    %398 = vmatprep.subr.mxu0 %v332
    %399 = vmatpush1.msra.mxu0 %v331
    %400 = vmatprep.subr.mxu0 %v372
    %401 = vmatpush1.msra.mxu0 %v371
    %402 = vmatprep.subr.mxu0 0.0
    %403 = vmatpush1.msra.mxu0 0.0
    %404 = vmatprep.subr.mxu0 0.0
    %405 = vmatpush1.msra.mxu0 0.0
    %406 = vmatprep.subr.mxu0 0.0
    %407 = vmatpush1.msra.mxu0 0.0
    %408 = vmatprep.subr.mxu0 0.0
    %409 = vmatpush1.msra.mxu0 0.0
    %410 = vmatprep.subr.mxu0 0.0
    %411 = vmatpush1.msra.mxu0 0.0
    %412 = vmatprep.subr.mxu0 0.0
    %413 = vmatpush1.msra.mxu0 0.0
    %414 = vmatprep.subr.mxu0 0.0
    %415 = vmatpush1.msra.mxu0 0.0
    %416 = vmatprep.subr.mxu0 0.0
    %417 = vmatpush1.msra.mxu0 0.0
    %418 = vmatprep.subr.mxu0 0.0
    %419 = vmatpush1.msra.mxu0 0.0
    %420 = vmatprep.subr.mxu0 0.0
    %421 = vmatpush1.msra.mxu0 0.0
    %422 = vmatprep.subr.mxu0 0.0
    %423 = vmatpush1.msra.mxu0 0.0
    %424 = vmatprep.subr.mxu0 0.0
    %425 = vmatpush1.msra.mxu0 0.0
    %426 = vmatprep.subr.mxu0 0.0
    %427 = vmatpush1.msra.mxu0 0.0
    %428 = vmatprep.subr.mxu0 0.0
    %429 = vmatpush1.msra.mxu0 0.0
    %430 = vmatprep.subr.mxu0 0.0
    %431 = vmatpush1.msra.mxu0 0.0
    %432 = vmatprep.subr.mxu0 0.0
    %433 = vmatpush1.msra.mxu0 0.0
    %434 = vmatprep.subr.mxu0 0.0
    %435 = vmatpush1.msra.mxu0 0.0
    %436 = vmatprep.subr.mxu0 0.0
    %437 = vmatpush1.msra.mxu0 0.0
    %438 = vmatprep.subr.mxu0 0.0
    %439 = vmatpush1.msra.mxu0 0.0
    %440 = vmatprep.subr.mxu0 0.0
    %441 = vmatpush1.msra.mxu0 0.0
    %442 = vmatprep.subr.mxu0 0.0
    %443 = vmatpush1.msra.mxu0 0.0
    %444 = vmatprep.subr.mxu0 0.0
    %445 = vmatpush1.msra.mxu0 0.0
    %446 = vmatprep.subr.mxu0 0.0
    %447 = vmatpush1.msra.mxu0 0.0
    %448 = vmatprep.mubr.f32.mxu0 0.0
    %449 = vmatmul.mubr.f32.gmra.mrb[0].mxu0 %v382
    %v450 = vpop.f32.mrb[0].mxu0
    %v451 = vadd.f32 %v378, %v450
    %v452 = vpop.f32.mrb[0].mxu0
    %v453 = vadd.f32 %v378, %v452
    %454 = vdwg.mxu0
    %455 = vmatprep.subr.mxu0 %v94
    %456 = vmatpush1.msra.mxu0 %v93
    %457 = vmatprep.subr.mxu0 %v134
    %458 = vmatpush1.msra.mxu0 %v133
    %459 = vmatprep.subr.mxu0 %v174
    %460 = vmatpush1.msra.mxu0 %v173
    %461 = vmatprep.subr.mxu0 %v214
    %462 = vmatpush1.msra.mxu0 %v213
    %463 = vmatprep.subr.mxu0 %v49
    %464 = vmatpush1.msra.mxu0 %v48
    %465 = vmatprep.subr.mxu0 %v254
    %466 = vmatpush1.msra.mxu0 %v253
    %467 = vmatprep.subr.mxu0 %v294
    %468 = vmatpush1.msra.mxu0 %v293
    %469 = vmatprep.subr.mxu0 %v334
    %470 = vmatpush1.msra.mxu0 %v333
    %471 = vmatprep.subr.mxu0 %v374
    %472 = vmatpush1.msra.mxu0 %v373
    %473 = vmatprep.subr.mxu0 0.0
    %474 = vmatpush1.msra.mxu0 0.0
    %475 = vmatprep.subr.mxu0 0.0
    %476 = vmatpush1.msra.mxu0 0.0
    %477 = vmatprep.subr.mxu0 0.0
    %478 = vmatpush1.msra.mxu0 0.0
    %479 = vmatprep.subr.mxu0 0.0
    %480 = vmatpush1.msra.mxu0 0.0
    %481 = vmatprep.subr.mxu0 0.0
    %482 = vmatpush1.msra.mxu0 0.0
    %483 = vmatprep.subr.mxu0 0.0
    %484 = vmatpush1.msra.mxu0 0.0
    %485 = vmatprep.subr.mxu0 0.0
    %486 = vmatpush1.msra.mxu0 0.0
    %487 = vmatprep.subr.mxu0 0.0
    %488 = vmatpush1.msra.mxu0 0.0
    %489 = vmatprep.subr.mxu0 0.0
    %490 = vmatpush1.msra.mxu0 0.0
    %491 = vmatprep.subr.mxu0 0.0
    %492 = vmatpush1.msra.mxu0 0.0
    %493 = vmatprep.subr.mxu0 0.0
    %494 = vmatpush1.msra.mxu0 0.0
    %495 = vmatprep.subr.mxu0 0.0
    %496 = vmatpush1.msra.mxu0 0.0
    %497 = vmatprep.subr.mxu0 0.0
    %498 = vmatpush1.msra.mxu0 0.0
    %499 = vmatprep.subr.mxu0 0.0
    %500 = vmatpush1.msra.mxu0 0.0
    %501 = vmatprep.subr.mxu0 0.0
    %502 = vmatpush1.msra.mxu0 0.0
    %503 = vmatprep.subr.mxu0 0.0
    %504 = vmatpush1.msra.mxu0 0.0
    %505 = vmatprep.subr.mxu0 0.0
    %506 = vmatpush1.msra.mxu0 0.0
    %507 = vmatprep.subr.mxu0 0.0
    %508 = vmatpush1.msra.mxu0 0.0
    %509 = vmatprep.subr.mxu0 0.0
    %510 = vmatpush1.msra.mxu0 0.0
    %511 = vmatprep.subr.mxu0 0.0
    %512 = vmatpush1.msra.mxu0 0.0
    %513 = vmatprep.subr.mxu0 0.0
    %514 = vmatpush1.msra.mxu0 0.0
    %515 = vmatprep.subr.mxu0 0.0
    %516 = vmatpush1.msra.mxu0 0.0
    %517 = vmatprep.subr.mxu0 0.0
    %518 = vmatpush1.msra.mxu0 0.0
    %519 = vmatprep.mubr.f32.mxu0 0.0
    %520 = vmatmul.mubr.f32.gmra.mrb[0].mxu0 %v382
    %v521 = vpop.f32.mrb[0].mxu0
    %v522 = vadd.f32 %v378, %v521
    %v523 = vpop.f32.mrb[0].mxu0
    %v524 = vadd.f32 %v378, %v523
    %525 = vdwg.mxu0
    %v526 = vmax.f32 %v451, 0.0
    %v527 = vmax.f32 %v453, 0.0
    %v528 = vmax.f32 %v522, 0.0
    %v529 = vmax.f32 %v524, 0.0
    %530 = vrot.lane.b32.xlu0 %v526, 17
    %v531 = vpop.permute.xlu0 %530
    %532 = vrot.lane.b32.xlu0 %v527, 17
    %v533 = vpop.permute.xlu0 %532
    %534 = vrot.lane.b32.xlu0 %v528, 17
    %v535 = vpop.permute.xlu0 %534
    %536 = vrot.lane.b32.xlu0 %v529, 17
    %v537 = vpop.permute.xlu0 %536
    %v538 = vsel %vm64, %v535, %v537
    %v539 = vsel %vm64, %v533, %v535
    %v540 = vsel %vm64, %v531, %v533
    %v541 = vsel %vm64, %v537, %v531
    %v542 = vmul.f32 %v541, %v74
    %v543 = vmul.f32 %v540, %v78
    %v544 = vmul.f32 %v539, %v82
    %v545 = vmul.f32 %v538, %v86
    %546 = vrot.lane.b32.xlu0 %v526, 16
    %v547 = vpop.permute.xlu0 %546
    %548 = vrot.lane.b32.xlu0 %v527, 16
    %v549 = vpop.permute.xlu0 %548
    %550 = vrot.lane.b32.xlu0 %v528, 16
    %v551 = vpop.permute.xlu0 %550
    %552 = vrot.lane.b32.xlu0 %v529, 16
    %v553 = vpop.permute.xlu0 %552
    %v554 = vsel %vm103, %v551, %v553
    %v555 = vsel %vm103, %v549, %v551
    %v556 = vsel %vm103, %v547, %v549
    %v557 = vsel %vm103, %v553, %v547
    %v558 = vmul.f32 %v557, %v114
    %v559 = vmul.f32 %v556, %v118
    %v560 = vmul.f32 %v555, %v122
    %v561 = vmul.f32 %v554, %v126
    %562 = vrot.lane.b32.xlu0 %v526, 15
    %v563 = vpop.permute.xlu0 %562
    %564 = vrot.lane.b32.xlu0 %v527, 15
    %v565 = vpop.permute.xlu0 %564
    %566 = vrot.lane.b32.xlu0 %v528, 15
    %v567 = vpop.permute.xlu0 %566
    %568 = vrot.lane.b32.xlu0 %v529, 15
    %v569 = vpop.permute.xlu0 %568
    %v570 = vsel %vm143, %v567, %v569
    %v571 = vsel %vm143, %v565, %v567
    %v572 = vsel %vm143, %v563, %v565
    %v573 = vsel %vm143, %v569, %v563
    %v574 = vmul.f32 %v573, %v154
    %v575 = vmul.f32 %v572, %v158
    %v576 = vmul.f32 %v571, %v162
    %v577 = vmul.f32 %v570, %v166
    %578 = vrot.lane.b32.xlu0 %v526, 1
    %v579 = vpop.permute.xlu0 %578
    %580 = vrot.lane.b32.xlu0 %v527, 1
    %v581 = vpop.permute.xlu0 %580
    %582 = vrot.lane.b32.xlu0 %v528, 1
    %v583 = vpop.permute.xlu0 %582
    %584 = vrot.lane.b32.xlu0 %v529, 1
    %v585 = vpop.permute.xlu0 %584
    %v586 = vsel %vm183, %v583, %v585
    %v587 = vsel %vm183, %v581, %v583
    %v588 = vsel %vm183, %v579, %v581
    %v589 = vsel %vm183, %v585, %v579
    %v590 = vmul.f32 %v589, %v194
    %v591 = vmul.f32 %v588, %v198
    %v592 = vmul.f32 %v587, %v202
    %v593 = vmul.f32 %v586, %v206
    %594 = vrot.lane.b32.xlu0 %v526, 127
    %v595 = vpop.permute.xlu0 %594
    %596 = vrot.lane.b32.xlu0 %v527, 127
    %v597 = vpop.permute.xlu0 %596
    %598 = vrot.lane.b32.xlu0 %v528, 127
    %v599 = vpop.permute.xlu0 %598
    %600 = vrot.lane.b32.xlu0 %v529, 127
    %v601 = vpop.permute.xlu0 %600
    %v602 = vsel %vm223, %v599, %v601
    %v603 = vsel %vm223, %v597, %v599
    %v604 = vsel %vm223, %v595, %v597
    %v605 = vsel %vm223, %v601, %v595
    %v606 = vmul.f32 %v604, %v234
    %v607 = vmul.f32 %v603, %v238
    %v608 = vmul.f32 %v602, %v242
    %v609 = vmul.f32 %v605, %v246
    %610 = vrot.lane.b32.xlu0 %v526, 113
    %v611 = vpop.permute.xlu0 %610
    %612 = vrot.lane.b32.xlu0 %v527, 113
    %v613 = vpop.permute.xlu0 %612
    %614 = vrot.lane.b32.xlu0 %v528, 113
    %v615 = vpop.permute.xlu0 %614
    %616 = vrot.lane.b32.xlu0 %v529, 113
    %v617 = vpop.permute.xlu0 %616
    %v618 = vsel %vm263, %v615, %v617
    %v619 = vsel %vm263, %v613, %v615
    %v620 = vsel %vm263, %v611, %v613
    %v621 = vsel %vm263, %v617, %v611
    %v622 = vmul.f32 %v620, %v274
    %v623 = vmul.f32 %v619, %v278
    %v624 = vmul.f32 %v618, %v282
    %v625 = vmul.f32 %v621, %v286
    %626 = vrot.lane.b32.xlu0 %v526, 112
    %v627 = vpop.permute.xlu0 %626
    %628 = vrot.lane.b32.xlu0 %v527, 112
    %v629 = vpop.permute.xlu0 %628
    %630 = vrot.lane.b32.xlu0 %v528, 112
    %v631 = vpop.permute.xlu0 %630
    %632 = vrot.lane.b32.xlu0 %v529, 112
    %v633 = vpop.permute.xlu0 %632
    %v634 = vsel %vm303, %v631, %v633
    %v635 = vsel %vm303, %v629, %v631
    %v636 = vsel %vm303, %v627, %v629
    %v637 = vsel %vm303, %v633, %v627
    %v638 = vmul.f32 %v636, %v314
    %v639 = vmul.f32 %v635, %v318
    %v640 = vmul.f32 %v634, %v322
    %v641 = vmul.f32 %v637, %v326
    %642 = vrot.lane.b32.xlu0 %v526, 111
    %v643 = vpop.permute.xlu0 %642
    %644 = vrot.lane.b32.xlu0 %v527, 111
    %v645 = vpop.permute.xlu0 %644
    %646 = vrot.lane.b32.xlu0 %v528, 111
    %v647 = vpop.permute.xlu0 %646
    %648 = vrot.lane.b32.xlu0 %v529, 111
    %v649 = vpop.permute.xlu0 %648
    %v650 = vsel %vm343, %v647, %v649
    %v651 = vsel %vm343, %v645, %v647
    %v652 = vsel %vm343, %v643, %v645
    %v653 = vsel %vm343, %v649, %v643
    %v654 = vmul.f32 %v652, %v354
    %v655 = vmul.f32 %v651, %v358
    %v656 = vmul.f32 %v650, %v362
    %v657 = vmul.f32 %v653, %v366
    %v662 = vrot.slane %v558, 6
    %v663 = vrot.slane %v559, 6
    %v664 = vrot.slane %v560, 6
    %v665 = vrot.slane %v561, 6
    %v674 = vrot.slane %v574, 4
    %v675 = vrot.slane %v575, 4
    %v676 = vrot.slane %v576, 4
    %v677 = vrot.slane %v577, 4
    %v686 = vrot.slane %v590, 2
    %v687 = vrot.slane %v591, 2
    %v688 = vrot.slane %v592, 2
    %v689 = vrot.slane %v593, 2
    %v698 = vrot.slane %v606, 6
    %v699 = vrot.slane %v607, 6
    %v700 = vrot.slane %v608, 6
    %v701 = vrot.slane %v609, 6
    %v710 = vrot.slane %v622, 4
    %v711 = vrot.slane %v623, 4
    %v712 = vrot.slane %v624, 4
    %v713 = vrot.slane %v625, 4
    %v722 = vrot.slane %v638, 2
    %v723 = vrot.slane %v639, 2
    %v724 = vrot.slane %v640, 2
    %v725 = vrot.slane %v641, 2
    %vm730 = vcmask 1041408
    %v731 = vsel %vm730, %v542, %v662
    %v732 = vsel %vm730, %v543, %v663
    %v733 = vsel %vm730, %v544, %v664
    %v734 = vsel %vm730, %v545, %v665
    %vm735 = vcmask 1043456
    %v736 = vsel %vm735, %v731, %v674
    %v737 = vsel %vm735, %v732, %v675
    %v738 = vsel %vm735, %v733, %v676
    %v739 = vsel %vm735, %v734, %v677
    %vm740 = vcmask 1045504
    %v741 = vsel %vm740, %v736, %v686
    %v742 = vsel %vm740, %v737, %v687
    %v743 = vsel %vm740, %v738, %v688
    %v744 = vsel %vm740, %v739, %v689
    %v745 = vsel %vm730, %v526, %v698
    %v746 = vsel %vm730, %v527, %v699
    %v747 = vsel %vm730, %v528, %v700
    %v748 = vsel %vm730, %v529, %v701
    %v749 = vsel %vm735, %v745, %v710
    %v750 = vsel %vm735, %v746, %v711
    %v751 = vsel %vm735, %v747, %v712
    %v752 = vsel %vm735, %v748, %v713
    %v753 = vsel %vm740, %v749, %v722
    %v754 = vsel %vm740, %v750, %v723
    %v755 = vsel %vm740, %v751, %v724
    %v756 = vsel %vm740, %v752, %v725
    %v757 = vrot.slane %v50, 2
    %v758 = vrot.slane %v378, 2
    %vm760 = vcmask 146432
    %v761 = vsel %vm760, %v757, 0
    %v764 = vsel %vm730, %v654, 0
    %v767 = vsel %vm730, %v655, 0
    %v770 = vsel %vm730, %v656, 0
    %v773 = vsel %vm730, %v657, 0
    %775 = vmatprep.subr.mxu0 %v742
    %776 = vmatpush1.msra.mxu0 %v741
    %777 = vmatprep.subr.mxu0 %v754
    %778 = vmatpush1.msra.mxu0 %v753
    %779 = vmatprep.subr.mxu0 %v767
    %780 = vmatpush1.msra.mxu0 %v764
    %781 = vmatprep.subr.mxu0 0.0
    %782 = vmatpush1.msra.mxu0 0.0
    %783 = vmatprep.subr.mxu0 0.0
    %784 = vmatpush1.msra.mxu0 0.0
    %785 = vmatprep.subr.mxu0 0.0
    %786 = vmatpush1.msra.mxu0 0.0
    %787 = vmatprep.subr.mxu0 0.0
    %788 = vmatpush1.msra.mxu0 0.0
    %789 = vmatprep.subr.mxu0 0.0
    %790 = vmatpush1.msra.mxu0 0.0
    %791 = vmatprep.subr.mxu0 0.0
    %792 = vmatpush1.msra.mxu0 0.0
    %793 = vmatprep.subr.mxu0 0.0
    %794 = vmatpush1.msra.mxu0 0.0
    %795 = vmatprep.subr.mxu0 0.0
    %796 = vmatpush1.msra.mxu0 0.0
    %797 = vmatprep.subr.mxu0 0.0
    %798 = vmatpush1.msra.mxu0 0.0
    %799 = vmatprep.subr.mxu0 0.0
    %800 = vmatpush1.msra.mxu0 0.0
    %801 = vmatprep.subr.mxu0 0.0
    %802 = vmatpush1.msra.mxu0 0.0
    %803 = vmatprep.subr.mxu0 0.0
    %804 = vmatpush1.msra.mxu0 0.0
    %805 = vmatprep.subr.mxu0 0.0
    %806 = vmatpush1.msra.mxu0 0.0
    %807 = vmatprep.subr.mxu0 0.0
    %808 = vmatpush1.msra.mxu0 0.0
    %809 = vmatprep.subr.mxu0 0.0
    %810 = vmatpush1.msra.mxu0 0.0
    %811 = vmatprep.subr.mxu0 0.0
    %812 = vmatpush1.msra.mxu0 0.0
    %813 = vmatprep.subr.mxu0 0.0
    %814 = vmatpush1.msra.mxu0 0.0
    %815 = vmatprep.subr.mxu0 0.0
    %816 = vmatpush1.msra.mxu0 0.0
    %817 = vmatprep.subr.mxu0 0.0
    %818 = vmatpush1.msra.mxu0 0.0
    %819 = vmatprep.subr.mxu0 0.0
    %820 = vmatpush1.msra.mxu0 0.0
    %821 = vmatprep.subr.mxu0 0.0
    %822 = vmatpush1.msra.mxu0 0.0
    %823 = vmatprep.subr.mxu0 0.0
    %824 = vmatpush1.msra.mxu0 0.0
    %825 = vmatprep.subr.mxu0 0.0
    %826 = vmatpush1.msra.mxu0 0.0
    %827 = vmatprep.subr.mxu0 0.0
    %828 = vmatpush1.msra.mxu0 0.0
    %829 = vmatprep.subr.mxu0 0.0
    %830 = vmatpush1.msra.mxu0 0.0
    %831 = vmatprep.subr.mxu0 0.0
    %832 = vmatpush1.msra.mxu0 0.0
    %833 = vmatprep.subr.mxu0 0.0
    %834 = vmatpush1.msra.mxu0 0.0
    %835 = vmatprep.subr.mxu0 0.0
    %836 = vmatpush1.msra.mxu0 0.0
    %837 = vmatprep.subr.mxu0 0.0
    %838 = vmatpush1.msra.mxu0 0.0
    %839 = vmatprep.mubr.f32.mxu0 0.0
    %840 = vmatmul.mubr.f32.gmra.mrb[0].mxu0 %v761
    %v841 = vpop.f32.mrb[0].mxu0
    %v842 = vadd.f32 %v758, %v841
    %v843 = vpop.f32.mrb[0].mxu0
    %v844 = vadd.f32 %v758, %v843
    %845 = vdwg.mxu0
    %846 = vmatprep.subr.mxu0 %v744
    %847 = vmatpush1.msra.mxu0 %v743
    %848 = vmatprep.subr.mxu0 %v756
    %849 = vmatpush1.msra.mxu0 %v755
    %850 = vmatprep.subr.mxu0 %v773
    %851 = vmatpush1.msra.mxu0 %v770
    %852 = vmatprep.subr.mxu0 0.0
    %853 = vmatpush1.msra.mxu0 0.0
    %854 = vmatprep.subr.mxu0 0.0
    %855 = vmatpush1.msra.mxu0 0.0
    %856 = vmatprep.subr.mxu0 0.0
    %857 = vmatpush1.msra.mxu0 0.0
    %858 = vmatprep.subr.mxu0 0.0
    %859 = vmatpush1.msra.mxu0 0.0
    %860 = vmatprep.subr.mxu0 0.0
    %861 = vmatpush1.msra.mxu0 0.0
    %862 = vmatprep.subr.mxu0 0.0
    %863 = vmatpush1.msra.mxu0 0.0
    %864 = vmatprep.subr.mxu0 0.0
    %865 = vmatpush1.msra.mxu0 0.0
    %866 = vmatprep.subr.mxu0 0.0
    %867 = vmatpush1.msra.mxu0 0.0
    %868 = vmatprep.subr.mxu0 0.0
    %869 = vmatpush1.msra.mxu0 0.0
    %870 = vmatprep.subr.mxu0 0.0
    %871 = vmatpush1.msra.mxu0 0.0
    %872 = vmatprep.subr.mxu0 0.0
    %873 = vmatpush1.msra.mxu0 0.0
    %874 = vmatprep.subr.mxu0 0.0
    %875 = vmatpush1.msra.mxu0 0.0
    %876 = vmatprep.subr.mxu0 0.0
    %877 = vmatpush1.msra.mxu0 0.0
    %878 = vmatprep.subr.mxu0 0.0
    %879 = vmatpush1.msra.mxu0 0.0
    %880 = vmatprep.subr.mxu0 0.0
    %881 = vmatpush1.msra.mxu0 0.0
    %882 = vmatprep.subr.mxu0 0.0
    %883 = vmatpush1.msra.mxu0 0.0
    %884 = vmatprep.subr.mxu0 0.0
    %885 = vmatpush1.msra.mxu0 0.0
    %886 = vmatprep.subr.mxu0 0.0
    %887 = vmatpush1.msra.mxu0 0.0
    %888 = vmatprep.subr.mxu0 0.0
    %889 = vmatpush1.msra.mxu0 0.0
    %890 = vmatprep.subr.mxu0 0.0
    %891 = vmatpush1.msra.mxu0 0.0
    %892 = vmatprep.subr.mxu0 0.0
    %893 = vmatpush1.msra.mxu0 0.0
    %894 = vmatprep.subr.mxu0 0.0
    %895 = vmatpush1.msra.mxu0 0.0
    %896 = vmatprep.subr.mxu0 0.0
    %897 = vmatpush1.msra.mxu0 0.0
    %898 = vmatprep.subr.mxu0 0.0
    %899 = vmatpush1.msra.mxu0 0.0
    %900 = vmatprep.subr.mxu0 0.0
    %901 = vmatpush1.msra.mxu0 0.0
    %902 = vmatprep.subr.mxu0 0.0
    %903 = vmatpush1.msra.mxu0 0.0
    %904 = vmatprep.subr.mxu0 0.0
    %905 = vmatpush1.msra.mxu0 0.0
    %906 = vmatprep.subr.mxu0 0.0
    %907 = vmatpush1.msra.mxu0 0.0
    %908 = vmatprep.subr.mxu0 0.0
    %909 = vmatpush1.msra.mxu0 0.0
    %910 = vmatprep.mubr.f32.mxu0 0.0
    %911 = vmatmul.mubr.f32.gmra.mrb[0].mxu0 %v761
    %v912 = vpop.f32.mrb[0].mxu0
    %v913 = vadd.f32 %v758, %v912
    %v914 = vpop.f32.mrb[0].mxu0
    %v915 = vadd.f32 %v758, %v914
    %916 = vdwg.mxu0
    %v917 = vmax.f32 %v842, 0.0
    %v918 = vmax.f32 %v844, 0.0
    %v919 = vmax.f32 %v913, 0.0
    %v920 = vmax.f32 %v915, 0.0
    %v925 = vrot.slane %v917, 4
    %v926 = vrot.slane %v918, 4
    %v927 = vrot.slane %v919, 4
    %v928 = vrot.slane %v920, 4
    %v933 = vmul.f32 %v378, %v925
    %v934 = vmul.f32 %v378, %v926
    %v935 = vmul.f32 %v378, %v927
    %v936 = vmul.f32 %v378, %v928
    %v941 = vrot.slane %v933, 4
    %v942 = vrot.slane %v934, 4
    %v943 = vrot.slane %v935, 4
    %v944 = vrot.slane %v936, 4
    %v949 = vsel %vm730, %v941, 0.0
    %v950 = vrot.slane %v949, 4
    %v951 = vadd.f32 %v949, %v950
    %v952 = vrot.slane %v951, 2
    %v953 = vadd.f32 %v951, %v952
    %v954 = vrot.slane %v953, 1
    %v955 = vadd.f32 %v953, %v954
    %v956 = vsel %vm730, %v942, 0.0
    %v957 = vrot.slane %v956, 4
    %v958 = vadd.f32 %v956, %v957
    %v959 = vrot.slane %v958, 2
    %v960 = vadd.f32 %v958, %v959
    %v961 = vrot.slane %v960, 1
    %v962 = vadd.f32 %v960, %v961
    %v963 = vsel %vm730, %v943, 0.0
    %v964 = vrot.slane %v963, 4
    %v965 = vadd.f32 %v963, %v964
    %v966 = vrot.slane %v965, 2
    %v967 = vadd.f32 %v965, %v966
    %v968 = vrot.slane %v967, 1
    %v969 = vadd.f32 %v967, %v968
    %v970 = vsel %vm730, %v944, 0.0
    %v971 = vrot.slane %v970, 4
    %v972 = vadd.f32 %v970, %v971
    %v973 = vrot.slane %v972, 2
    %v974 = vadd.f32 %v972, %v973
    %v975 = vrot.slane %v974, 1
    %v976 = vadd.f32 %v974, %v975
    %v977 = vadd.f32 %v955, %v378
    %v978 = vadd.f32 %v962, %v378
    %v979 = vadd.f32 %v969, %v378
    %v980 = vadd.f32 %v976, %v378
    %v981 = vxor.u32 %v977, 2147483648
    %v982 = vxor.u32 %v978, 2147483648
    %v983 = vxor.u32 %v979, 2147483648
    %v984 = vxor.u32 %v980, 2147483648
    %v985 = vmul.f32 %v981, 1.442695
    %v986 = vpow.pop %v985
    %v987 = vmul.f32 %v982, 1.442695
    %v988 = vpow.pop %v987
    %v989 = vmul.f32 %v983, 1.442695
    %v990 = vpow.pop %v989
    %v991 = vmul.f32 %v984, 1.442695
    %v992 = vpow.pop %v991
    %v993 = vadd.f32 %v986, 1.0
    %v994 = vadd.f32 %v988, 1.0
    %v995 = vadd.f32 %v990, 1.0
    %v996 = vadd.f32 %v992, 1.0
    %v997 = vrcp.pop %v993
    %v998 = vmul.f32 1.0, %v997
    %v999 = vrcp.pop %v994
    %v1000 = vmul.f32 1.0, %v999
    %v1001 = vrcp.pop %v995
    %v1002 = vmul.f32 1.0, %v1001
    %v1003 = vrcp.pop %v996
    %v1004 = vmul.f32 1.0, %v1003
    %v1005 = vadd.f32 %v998, 1.0
    %v1006 = vadd.f32 %v1000, 1.0
    %v1007 = vadd.f32 %v1002, 1.0
    %v1008 = vadd.f32 %v1004, 1.0
    %v1009 = vlaneseq
    %v1010 = vshrl.u32 %v1009, 7
    %v1011 = vsub.s32 6, %v1010
    %v1012 = vrot.slane %v1005, %v1011
    %v1013 = vlaneseq
    %v1014 = vshrl.u32 %v1013, 7
    %v1015 = vsub.s32 6, %v1014
    %v1016 = vrot.slane %v1006, %v1015
    %v1017 = vlaneseq
    %v1018 = vshrl.u32 %v1017, 7
    %v1019 = vsub.s32 6, %v1018
    %v1020 = vrot.slane %v1007, %v1019
    %v1021 = vlaneseq
    %v1022 = vshrl.u32 %v1021, 7
    %v1023 = vsub.s32 6, %v1022
    %v1024 = vrot.slane %v1008, %v1023
    %v1025 = vmul.f32 %v46, %v1012
    %v1026 = vmul.f32 %v47, %v1016
    %v1027 = vmul.f32 %v48, %v1020
    %v1028 = vmul.f32 %v49, %v1024
    %v1029 = vld [vmem:[%s5] sm:$0xff]
    %v1030 = vld [vmem:[%s5 + $0x8] sm:$0xff]
    %v1031 = vld [vmem:[%s5 + $0x10] sm:$0xff]
    %v1032 = vld [vmem:[%s5 + $0x18] sm:$0xff]
    %v1033 = vld [vmem:[%s5 + $0x20] sm:$0xff]
    %v1034 = vld [vmem:[%s5 + $0x28] sm:$0xff]
    %v1035 = vld [vmem:[%s5 + $0x30] sm:$0xff]
    %v1036 = vld [vmem:[%s5 + $0x38] sm:$0xff]
    %v1037 = vld [vmem:[%s5 + $0x40] sm:$0xff]
    %v1038 = vld [vmem:[%s5 + $0x48] sm:$0xff]
    %v1039 = vld [vmem:[%s5 + $0x50] sm:$0xff]
    %v1040 = vld [vmem:[%s5 + $0x58] sm:$0xff]
    %v1041 = vld [vmem:[%s5 + $0x60] sm:$0xff]
    %v1042 = vld [vmem:[%s5 + $0x68] sm:$0xff]
    %v1043 = vld [vmem:[%s5 + $0x70] sm:$0xff]
    %v1044 = vld [vmem:[%s5 + $0x78] sm:$0xff]
    %v1045 = vld [vmem:[%s5 + $0x80] sm:$0xff]
    %v1046 = vld [vmem:[%s5 + $0x88] sm:$0xff]
    %v1047 = vld [vmem:[%s5 + $0x90] sm:$0xff]
    %v1048 = vld [vmem:[%s5 + $0x98] sm:$0xff]
    %v1049 = vld [vmem:[%s5 + $0xa0] sm:$0xff]
    %v1050 = vld [vmem:[%s5 + $0xa8] sm:$0xff]
    %v1051 = vld [vmem:[%s5 + $0xb0] sm:$0xff]
    %v1052 = vld [vmem:[%s5 + $0xb8] sm:$0xff]
    %v1053 = vld [vmem:[%s5 + $0xc0] sm:$0xff]
    %v1054 = vld [vmem:[%s5 + $0xc8] sm:$0xff]
    %v1055 = vld [vmem:[%s5 + $0xd0] sm:$0xff]
    %v1056 = vld [vmem:[%s5 + $0xd8] sm:$0xff]
    %v1057 = vld [vmem:[%s5 + $0xe0] sm:$0xff]
    %v1058 = vld [vmem:[%s5 + $0xe8] sm:$0xff]
    %v1059 = vld [vmem:[%s5 + $0xf0] sm:$0xff]
    %v1060 = vld [vmem:[%s5 + $0xf8] sm:$0xff]
    %v1061 = vld [vmem:[%s5 + $0x100] sm:$0xff]
    %v1062 = vld [vmem:[%s5 + $0x108] sm:$0xff]
    %v1063 = vld [vmem:[%s5 + $0x110] sm:$0xff]
    %v1064 = vld [vmem:[%s5 + $0x118] sm:$0xff]
    %v1065 = vld [vmem:[%s5 + $0x120] sm:$0xff]
    %v1066 = vld [vmem:[%s5 + $0x128] sm:$0xff]
    %v1067 = vld [vmem:[%s5 + $0x130] sm:$0xff]
    %v1068 = vld [vmem:[%s5 + $0x138] sm:$0xff]
    %v1069 = vld [vmem:[%s5 + $0x140] sm:$0xff]
    %v1070 = vld [vmem:[%s5 + $0x148] sm:$0xff]
    %v1071 = vld [vmem:[%s5 + $0x150] sm:$0xff]
    %v1072 = vld [vmem:[%s5 + $0x158] sm:$0xff]
    %v1073 = vld [vmem:[%s5 + $0x160] sm:$0xff]
    %v1074 = vld [vmem:[%s5 + $0x168] sm:$0xff]
    %v1075 = vld [vmem:[%s5 + $0x170] sm:$0xff]
    %v1076 = vld [vmem:[%s5 + $0x178] sm:$0xff]
    %v1077 = vld [vmem:[%s5 + $0x180] sm:$0xff]
    %v1078 = vld [vmem:[%s5 + $0x188] sm:$0xff]
    %v1079 = vld [vmem:[%s5 + $0x190] sm:$0xff]
    %v1080 = vld [vmem:[%s5 + $0x198] sm:$0xff]
    %v1081 = vld [vmem:[%s5 + $0x1a0] sm:$0xff]
    %v1082 = vld [vmem:[%s5 + $0x1a8] sm:$0xff]
    %v1083 = vld [vmem:[%s5 + $0x1b0] sm:$0xff]
    %v1084 = vld [vmem:[%s5 + $0x1b8] sm:$0xff]
    %v1085 = vld [vmem:[%s5 + $0x1c0] sm:$0xff]
    %v1086 = vld [vmem:[%s5 + $0x1c8] sm:$0xff]
    %v1087 = vld [vmem:[%s5 + $0x1d0] sm:$0xff]
    %v1088 = vld [vmem:[%s5 + $0x1d8] sm:$0xff]
    %v1089 = vld [vmem:[%s5 + $0x1e0] sm:$0xff]
    %v1090 = vld [vmem:[%s5 + $0x1e8] sm:$0xff]
    %v1091 = vld [vmem:[%s5 + $0x1f0] sm:$0xff]
    %v1092 = vld [vmem:[%s5 + $0x1f8] sm:$0xff]
    %1093 = vmatprep.subr.mxu0 0.0
    %1094 = vmatpush1.msra.mxu0 %v1029
    %1095 = vmatprep.subr.mxu0 0.0
    %1096 = vmatpush1.msra.mxu0 %v1030
    %1097 = vmatprep.subr.mxu0 0.0
    %1098 = vmatpush1.msra.mxu0 %v1031
    %1099 = vmatprep.subr.mxu0 0.0
    %1100 = vmatpush1.msra.mxu0 %v1032
    %1101 = vmatprep.subr.mxu0 0.0
    %1102 = vmatpush1.msra.mxu0 %v1033
    %1103 = vmatprep.subr.mxu0 0.0
    %1104 = vmatpush1.msra.mxu0 %v1034
    %1105 = vmatprep.subr.mxu0 0.0
    %1106 = vmatpush1.msra.mxu0 %v1035
    %1107 = vmatprep.subr.mxu0 0.0
    %1108 = vmatpush1.msra.mxu0 %v1036
    %1109 = vmatprep.subr.mxu0 0.0
    %1110 = vmatpush1.msra.mxu0 %v1037
    %1111 = vmatprep.subr.mxu0 0.0
    %1112 = vmatpush1.msra.mxu0 %v1038
    %1113 = vmatprep.subr.mxu0 0.0
    %1114 = vmatpush1.msra.mxu0 %v1039
    %1115 = vmatprep.subr.mxu0 0.0
    %1116 = vmatpush1.msra.mxu0 %v1040
    %1117 = vmatprep.subr.mxu0 0.0
    %1118 = vmatpush1.msra.mxu0 %v1041
    %1119 = vmatprep.subr.mxu0 0.0
    %1120 = vmatpush1.msra.mxu0 %v1042
    %1121 = vmatprep.subr.mxu0 0.0
    %1122 = vmatpush1.msra.mxu0 %v1043
    %1123 = vmatprep.subr.mxu0 0.0
    %1124 = vmatpush1.msra.mxu0 %v1044
    %1125 = vmatprep.subr.mxu0 0.0
    %1126 = vmatpush1.msra.mxu0 %v1045
    %1127 = vmatprep.subr.mxu0 0.0
    %1128 = vmatpush1.msra.mxu0 %v1046
    %1129 = vmatprep.subr.mxu0 0.0
    %1130 = vmatpush1.msra.mxu0 %v1047
    %1131 = vmatprep.subr.mxu0 0.0
    %1132 = vmatpush1.msra.mxu0 %v1048
    %1133 = vmatprep.subr.mxu0 0.0
    %1134 = vmatpush1.msra.mxu0 %v1049
    %1135 = vmatprep.subr.mxu0 0.0
    %1136 = vmatpush1.msra.mxu0 %v1050
    %1137 = vmatprep.subr.mxu0 0.0
    %1138 = vmatpush1.msra.mxu0 %v1051
    %1139 = vmatprep.subr.mxu0 0.0
    %1140 = vmatpush1.msra.mxu0 %v1052
    %1141 = vmatprep.subr.mxu0 0.0
    %1142 = vmatpush1.msra.mxu0 %v1053
    %1143 = vmatprep.subr.mxu0 0.0
    %1144 = vmatpush1.msra.mxu0 %v1054
    %1145 = vmatprep.subr.mxu0 0.0
    %1146 = vmatpush1.msra.mxu0 %v1055
    %1147 = vmatprep.subr.mxu0 0.0
    %1148 = vmatpush1.msra.mxu0 %v1056
    %1149 = vmatprep.subr.mxu0 0.0
    %1150 = vmatpush1.msra.mxu0 %v1057
    %1151 = vmatprep.subr.mxu0 0.0
    %1152 = vmatpush1.msra.mxu0 %v1058
    %1153 = vmatprep.subr.mxu0 0.0
    %1154 = vmatpush1.msra.mxu0 %v1059
    %1155 = vmatprep.subr.mxu0 0.0
    %1156 = vmatpush1.msra.mxu0 %v1060
    %1157 = vmatprep.mubr.f32.mxu0 %v1026
    %1158 = vmatmul.mubr.f32.gmra.mrb[0].mxu0 %v1025
    %v1159 = vpop.f32.mrb[0].mxu0
    %v1160 = vadd.f32 0.0, %v1159
    %v1161 = vpop.f32.mrb[0].mxu0
    %1162 = vdwg.mxu0
    %1163 = vmatprep.subr.mxu0 0.0
    %1164 = vmatpush1.msra.mxu0 %v1061
    %1165 = vmatprep.subr.mxu0 0.0
    %1166 = vmatpush1.msra.mxu0 %v1062
    %1167 = vmatprep.subr.mxu0 0.0
    %1168 = vmatpush1.msra.mxu0 %v1063
    %1169 = vmatprep.subr.mxu0 0.0
    %1170 = vmatpush1.msra.mxu0 %v1064
    %1171 = vmatprep.subr.mxu0 0.0
    %1172 = vmatpush1.msra.mxu0 %v1065
    %1173 = vmatprep.subr.mxu0 0.0
    %1174 = vmatpush1.msra.mxu0 %v1066
    %1175 = vmatprep.subr.mxu0 0.0
    %1176 = vmatpush1.msra.mxu0 %v1067
    %1177 = vmatprep.subr.mxu0 0.0
    %1178 = vmatpush1.msra.mxu0 %v1068
    %1179 = vmatprep.subr.mxu0 0.0
    %1180 = vmatpush1.msra.mxu0 %v1069
    %1181 = vmatprep.subr.mxu0 0.0
    %1182 = vmatpush1.msra.mxu0 %v1070
    %1183 = vmatprep.subr.mxu0 0.0
    %1184 = vmatpush1.msra.mxu0 %v1071
    %1185 = vmatprep.subr.mxu0 0.0
    %1186 = vmatpush1.msra.mxu0 %v1072
    %1187 = vmatprep.subr.mxu0 0.0
    %1188 = vmatpush1.msra.mxu0 %v1073
    %1189 = vmatprep.subr.mxu0 0.0
    %1190 = vmatpush1.msra.mxu0 %v1074
    %1191 = vmatprep.subr.mxu0 0.0
    %1192 = vmatpush1.msra.mxu0 %v1075
    %1193 = vmatprep.subr.mxu0 0.0
    %1194 = vmatpush1.msra.mxu0 %v1076
    %1195 = vmatprep.subr.mxu0 0.0
    %1196 = vmatpush1.msra.mxu0 %v1077
    %1197 = vmatprep.subr.mxu0 0.0
    %1198 = vmatpush1.msra.mxu0 %v1078
    %1199 = vmatprep.subr.mxu0 0.0
    %1200 = vmatpush1.msra.mxu0 %v1079
    %1201 = vmatprep.subr.mxu0 0.0
    %1202 = vmatpush1.msra.mxu0 %v1080
    %1203 = vmatprep.subr.mxu0 0.0
    %1204 = vmatpush1.msra.mxu0 %v1081
    %1205 = vmatprep.subr.mxu0 0.0
    %1206 = vmatpush1.msra.mxu0 %v1082
    %1207 = vmatprep.subr.mxu0 0.0
    %1208 = vmatpush1.msra.mxu0 %v1083
    %1209 = vmatprep.subr.mxu0 0.0
    %1210 = vmatpush1.msra.mxu0 %v1084
    %1211 = vmatprep.subr.mxu0 0.0
    %1212 = vmatpush1.msra.mxu0 %v1085
    %1213 = vmatprep.subr.mxu0 0.0
    %1214 = vmatpush1.msra.mxu0 %v1086
    %1215 = vmatprep.subr.mxu0 0.0
    %1216 = vmatpush1.msra.mxu0 %v1087
    %1217 = vmatprep.subr.mxu0 0.0
    %1218 = vmatpush1.msra.mxu0 %v1088
    %1219 = vmatprep.subr.mxu0 0.0
    %1220 = vmatpush1.msra.mxu0 %v1089
    %1221 = vmatprep.subr.mxu0 0.0
    %1222 = vmatpush1.msra.mxu0 %v1090
    %1223 = vmatprep.subr.mxu0 0.0
    %1224 = vmatpush1.msra.mxu0 %v1091
    %1225 = vmatprep.subr.mxu0 0.0
    %1226 = vmatpush1.msra.mxu0 %v1092
    %1227 = vmatprep.mubr.f32.mxu0 %v1028
    %1228 = vmatmul.mubr.f32.gmra.mrb[0].mxu0 %v1027
    %v1229 = vpop.f32.mrb[0].mxu0
    %v1230 = vadd.f32 %v1160, %v1229
    %v1231 = vpop.f32.mrb[0].mxu0
    %1232 = vdwg.mxu0
    %v1233 = vld [vmem:[%s4] sm:$0x3]
    %1235 = vset.pattern.permute.xlu0 0
    %1236 = vperm.xlu0 %1235, %v53
    %v1237 = vpop.permute.xlu0 %1236
    %vm1239 = vcmask 64512
    %v1241 = vsel %vm1239, %v1233, 0
    %1243 = vmatprep.subr.mxu0 0.0
    %1244 = vmatpush1.msra.mxu0 %v1230
    %1245 = vmatprep.subr.mxu0 0.0
    %1246 = vmatpush1.msra.mxu0 0.0
    %1247 = vmatprep.subr.mxu0 0.0
    %1248 = vmatpush1.msra.mxu0 0.0
    %1249 = vmatprep.subr.mxu0 0.0
    %1250 = vmatpush1.msra.mxu0 0.0
    %1251 = vmatprep.subr.mxu0 0.0
    %1252 = vmatpush1.msra.mxu0 0.0
    %1253 = vmatprep.subr.mxu0 0.0
    %1254 = vmatpush1.msra.mxu0 0.0
    %1255 = vmatprep.subr.mxu0 0.0
    %1256 = vmatpush1.msra.mxu0 0.0
    %1257 = vmatprep.subr.mxu0 0.0
    %1258 = vmatpush1.msra.mxu0 0.0
    %1259 = vmatprep.subr.mxu0 0.0
    %1260 = vmatpush1.msra.mxu0 0.0
    %1261 = vmatprep.subr.mxu0 0.0
    %1262 = vmatpush1.msra.mxu0 0.0
    %1263 = vmatprep.subr.mxu0 0.0
    %1264 = vmatpush1.msra.mxu0 0.0
    %1265 = vmatprep.subr.mxu0 0.0
    %1266 = vmatpush1.msra.mxu0 0.0
    %1267 = vmatprep.subr.mxu0 0.0
    %1268 = vmatpush1.msra.mxu0 0.0
    %1269 = vmatprep.subr.mxu0 0.0
    %1270 = vmatpush1.msra.mxu0 0.0
    %1271 = vmatprep.subr.mxu0 0.0
    %1272 = vmatpush1.msra.mxu0 0.0
    %1273 = vmatprep.subr.mxu0 0.0
    %1274 = vmatpush1.msra.mxu0 0.0
    %1275 = vmatprep.subr.mxu0 0.0
    %1276 = vmatpush1.msra.mxu0 0.0
    %1277 = vmatprep.subr.mxu0 0.0
    %1278 = vmatpush1.msra.mxu0 0.0
    %1279 = vmatprep.subr.mxu0 0.0
    %1280 = vmatpush1.msra.mxu0 0.0
    %1281 = vmatprep.subr.mxu0 0.0
    %1282 = vmatpush1.msra.mxu0 0.0
    %1283 = vmatprep.subr.mxu0 0.0
    %1284 = vmatpush1.msra.mxu0 0.0
    %1285 = vmatprep.subr.mxu0 0.0
    %1286 = vmatpush1.msra.mxu0 0.0
    %1287 = vmatprep.subr.mxu0 0.0
    %1288 = vmatpush1.msra.mxu0 0.0
    %1289 = vmatprep.subr.mxu0 0.0
    %1290 = vmatpush1.msra.mxu0 0.0
    %1291 = vmatprep.subr.mxu0 0.0
    %1292 = vmatpush1.msra.mxu0 0.0
    %1293 = vmatprep.subr.mxu0 0.0
    %1294 = vmatpush1.msra.mxu0 0.0
    %1295 = vmatprep.subr.mxu0 0.0
    %1296 = vmatpush1.msra.mxu0 0.0
    %1297 = vmatprep.subr.mxu0 0.0
    %1298 = vmatpush1.msra.mxu0 0.0
    %1299 = vmatprep.subr.mxu0 0.0
    %1300 = vmatpush1.msra.mxu0 0.0
    %1301 = vmatprep.subr.mxu0 0.0
    %1302 = vmatpush1.msra.mxu0 0.0
    %1303 = vmatprep.subr.mxu0 0.0
    %1304 = vmatpush1.msra.mxu0 0.0
    %1305 = vmatprep.subr.mxu0 0.0
    %1306 = vmatpush1.msra.mxu0 0.0
    %1307 = vmatprep.mubr.f32.mxu0 0.0
    %1308 = vmatmul.mubr.f32.gmra.mrb[0].mxu0 %v1241
    %v1309 = vpop.f32.mrb[0].mxu0
    %v1310 = vadd.f32 %v1237, %v1309
    %v1311 = vpop.f32.mrb[0].mxu0
    %1312 = vdwg.mxu0
    %v1313 = vmax.f32 %v1310, 0.0
    %v1315 = vrot.slane %v1313, 6
    %v1317 = vmul.f32 %v1237, %v1315
    %v1319 = vrot.slane %v1317, 2
    %vm1321 = vcmask 9216
    %v1322 = vsel %vm1321, %v1319, 0.0
    %v1323 = vrot.slane %v1322, 4
    %v1324 = vadd.f32 %v1322, %v1323
    %v1325 = vrot.slane %v1324, 2
    %v1326 = vadd.f32 %v1324, %v1325
    %v1327 = vrot.slane %v1326, 1
    %v1328 = vadd.f32 %v1326, %v1327
    %v1329 = vadd.f32 %v1328, %v1237
    %v1330 = vxor.u32 %v1329, 2147483648
    %v1331 = vmul.f32 %v1330, 1.442695
    %v1332 = vpow.pop %v1331
    %v1333 = vadd.f32 %v1332, 1.0
    %v1334 = vrcp.pop %v1333
    %v1335 = vmul.f32 1.0, %v1334
    %s1336 = sld [smem:[#allocation2]]
    %s1337 = sld [smem:[#allocation2 + $0x1]]
    %s1338 = sld [smem:[#allocation2 + $0x2]]
    %v1339 = vsub.f32 %v1335, 0.5
    %v1340 = vstv %s1337
    %v1341 = vmul.f32 %v1339, %v1340
    %v1342 = vstv %s1336
    %v1343 = vadd.f32 %v1342, %v1341
    %v1344 = vmax.f32 %v1343, 0.1
    %v1345 = vmin.f32 %v1344, 0.9
    %v1346 = vld [vmem:[%s6] ss:$2 sm:$0xf]
    %1348 = vset.pattern.permute.xlu0 0
    %1349 = vperm.xlu0 %1348, %v1345
    %v1350 = vpop.permute.xlu0 %1349
    %v1353 = vlaneseq
    %v1354 = vshrl.u32 %v1353, 7
    %v1355 = vsub.s32 0, %v1354
    %v1356 = vrot.slane %v1346, %v1355
    %v1357 = vlaneseq
    %v1358 = vshrl.u32 %v1357, 7
    %v1359 = vsub.s32 1, %v1358
    %v1360 = vrot.slane %v1346, %v1359
    %v1361 = vlaneseq
    %v1362 = vshrl.u32 %v1361, 7
    %v1363 = vsub.s32 2, %v1362
    %v1364 = vrot.slane %v1346, %v1363
    %v1365 = vlaneseq
    %v1366 = vshrl.u32 %v1365, 7
    %v1367 = vsub.s32 3, %v1366
    %v1368 = vrot.slane %v1346, %v1367
    %v1373 = vmul.f32 %v1350, %v1356
    %v1374 = vmul.f32 %v1350, %v1360
    %v1375 = vmul.f32 %v1350, %v1364
    %v1376 = vmul.f32 %v1350, %v1368
    %s1377 = scalar_lea.vmem %s6, 1
    %v1378 = vld [vmem:[%s1377] ss:$2 sm:$0xf]
    %1379 = vset.pattern.permute.xlu0 1
    %1380 = vperm.xlu0 %1379, %v1345
    %v1381 = vpop.permute.xlu0 %1380
    %v1384 = vlaneseq
    %v1385 = vshrl.u32 %v1384, 7
    %v1386 = vsub.s32 0, %v1385
    %v1387 = vrot.slane %v1378, %v1386
    %v1388 = vlaneseq
    %v1389 = vshrl.u32 %v1388, 7
    %v1390 = vsub.s32 1, %v1389
    %v1391 = vrot.slane %v1378, %v1390
    %v1392 = vlaneseq
    %v1393 = vshrl.u32 %v1392, 7
    %v1394 = vsub.s32 2, %v1393
    %v1395 = vrot.slane %v1378, %v1394
    %v1396 = vlaneseq
    %v1397 = vshrl.u32 %v1396, 7
    %v1398 = vsub.s32 3, %v1397
    %v1399 = vrot.slane %v1378, %v1398
    %v1404 = vmul.f32 %v1381, %v1387
    %v1405 = vmul.f32 %v1381, %v1391
    %v1406 = vmul.f32 %v1381, %v1395
    %v1407 = vmul.f32 %v1381, %v1399
    %v1408 = vadd.f32 %v1373, %v1404
    %v1409 = vadd.f32 %v1374, %v1405
    %v1410 = vadd.f32 %v1375, %v1406
    %v1411 = vadd.f32 %v1376, %v1407
    %1412 = vrot.lane.b32.xlu0 %v1025, 17
    %v1413 = vpop.permute.xlu0 %1412
    %1414 = vrot.lane.b32.xlu0 %v1026, 17
    %v1415 = vpop.permute.xlu0 %1414
    %1416 = vrot.lane.b32.xlu0 %v1027, 17
    %v1417 = vpop.permute.xlu0 %1416
    %1418 = vrot.lane.b32.xlu0 %v1028, 17
    %v1419 = vpop.permute.xlu0 %1418
    %v1420 = vsel %vm64, %v1417, %v1419
    %v1421 = vsel %vm64, %v1415, %v1417
    %v1422 = vsel %vm64, %v1413, %v1415
    %v1423 = vsel %vm64, %v1419, %v1413
    %v1424 = vmul.f32 %v1423, %v74
    %v1425 = vmul.f32 %v1422, %v78
    %v1426 = vmul.f32 %v1421, %v82
    %v1427 = vmul.f32 %v1420, %v86
    %1428 = vrot.lane.b32.xlu0 %v1025, 16
    %v1429 = vpop.permute.xlu0 %1428
    %1430 = vrot.lane.b32.xlu0 %v1026, 16
    %v1431 = vpop.permute.xlu0 %1430
    %1432 = vrot.lane.b32.xlu0 %v1027, 16
    %v1433 = vpop.permute.xlu0 %1432
    %1434 = vrot.lane.b32.xlu0 %v1028, 16
    %v1435 = vpop.permute.xlu0 %1434
    %v1436 = vsel %vm103, %v1433, %v1435
    %v1437 = vsel %vm103, %v1431, %v1433
    %v1438 = vsel %vm103, %v1429, %v1431
    %v1439 = vsel %vm103, %v1435, %v1429
    %v1440 = vmul.f32 %v1439, %v114
    %v1441 = vmul.f32 %v1438, %v118
    %v1442 = vmul.f32 %v1437, %v122
    %v1443 = vmul.f32 %v1436, %v126
    %1444 = vrot.lane.b32.xlu0 %v1025, 15
    %v1445 = vpop.permute.xlu0 %1444
    %1446 = vrot.lane.b32.xlu0 %v1026, 15
    %v1447 = vpop.permute.xlu0 %1446
    %1448 = vrot.lane.b32.xlu0 %v1027, 15
    %v1449 = vpop.permute.xlu0 %1448
    %1450 = vrot.lane.b32.xlu0 %v1028, 15
    %v1451 = vpop.permute.xlu0 %1450
    %v1452 = vsel %vm143, %v1449, %v1451
    %v1453 = vsel %vm143, %v1447, %v1449
    %v1454 = vsel %vm143, %v1445, %v1447
    %v1455 = vsel %vm143, %v1451, %v1445
    %v1456 = vmul.f32 %v1455, %v154
    %v1457 = vmul.f32 %v1454, %v158
    %v1458 = vmul.f32 %v1453, %v162
    %v1459 = vmul.f32 %v1452, %v166
    %1460 = vrot.lane.b32.xlu0 %v1025, 1
    %v1461 = vpop.permute.xlu0 %1460
    %1462 = vrot.lane.b32.xlu0 %v1026, 1
    %v1463 = vpop.permute.xlu0 %1462
    %1464 = vrot.lane.b32.xlu0 %v1027, 1
    %v1465 = vpop.permute.xlu0 %1464
    %1466 = vrot.lane.b32.xlu0 %v1028, 1
    %v1467 = vpop.permute.xlu0 %1466
    %v1468 = vsel %vm183, %v1465, %v1467
    %v1469 = vsel %vm183, %v1463, %v1465
    %v1470 = vsel %vm183, %v1461, %v1463
    %v1471 = vsel %vm183, %v1467, %v1461
    %v1472 = vmul.f32 %v1471, %v194
    %v1473 = vmul.f32 %v1470, %v198
    %v1474 = vmul.f32 %v1469, %v202
    %v1475 = vmul.f32 %v1468, %v206
    %1476 = vrot.lane.b32.xlu0 %v1025, 127
    %v1477 = vpop.permute.xlu0 %1476
    %1478 = vrot.lane.b32.xlu0 %v1026, 127
    %v1479 = vpop.permute.xlu0 %1478
    %1480 = vrot.lane.b32.xlu0 %v1027, 127
    %v1481 = vpop.permute.xlu0 %1480
    %1482 = vrot.lane.b32.xlu0 %v1028, 127
    %v1483 = vpop.permute.xlu0 %1482
    %v1484 = vsel %vm223, %v1481, %v1483
    %v1485 = vsel %vm223, %v1479, %v1481
    %v1486 = vsel %vm223, %v1477, %v1479
    %v1487 = vsel %vm223, %v1483, %v1477
    %v1488 = vmul.f32 %v1486, %v234
    %v1489 = vmul.f32 %v1485, %v238
    %v1490 = vmul.f32 %v1484, %v242
    %v1491 = vmul.f32 %v1487, %v246
    %1492 = vrot.lane.b32.xlu0 %v1025, 113
    %v1493 = vpop.permute.xlu0 %1492
    %1494 = vrot.lane.b32.xlu0 %v1026, 113
    %v1495 = vpop.permute.xlu0 %1494
    %1496 = vrot.lane.b32.xlu0 %v1027, 113
    %v1497 = vpop.permute.xlu0 %1496
    %1498 = vrot.lane.b32.xlu0 %v1028, 113
    %v1499 = vpop.permute.xlu0 %1498
    %v1500 = vsel %vm263, %v1497, %v1499
    %v1501 = vsel %vm263, %v1495, %v1497
    %v1502 = vsel %vm263, %v1493, %v1495
    %v1503 = vsel %vm263, %v1499, %v1493
    %v1504 = vmul.f32 %v1502, %v274
    %v1505 = vmul.f32 %v1501, %v278
    %v1506 = vmul.f32 %v1500, %v282
    %v1507 = vmul.f32 %v1503, %v286
    %1508 = vrot.lane.b32.xlu0 %v1025, 112
    %v1509 = vpop.permute.xlu0 %1508
    %1510 = vrot.lane.b32.xlu0 %v1026, 112
    %v1511 = vpop.permute.xlu0 %1510
    %1512 = vrot.lane.b32.xlu0 %v1027, 112
    %v1513 = vpop.permute.xlu0 %1512
    %1514 = vrot.lane.b32.xlu0 %v1028, 112
    %v1515 = vpop.permute.xlu0 %1514
    %v1516 = vsel %vm303, %v1513, %v1515
    %v1517 = vsel %vm303, %v1511, %v1513
    %v1518 = vsel %vm303, %v1509, %v1511
    %v1519 = vsel %vm303, %v1515, %v1509
    %v1520 = vmul.f32 %v1518, %v314
    %v1521 = vmul.f32 %v1517, %v318
    %v1522 = vmul.f32 %v1516, %v322
    %v1523 = vmul.f32 %v1519, %v326
    %1524 = vrot.lane.b32.xlu0 %v1025, 111
    %v1525 = vpop.permute.xlu0 %1524
    %1526 = vrot.lane.b32.xlu0 %v1026, 111
    %v1527 = vpop.permute.xlu0 %1526
    %1528 = vrot.lane.b32.xlu0 %v1027, 111
    %v1529 = vpop.permute.xlu0 %1528
    %1530 = vrot.lane.b32.xlu0 %v1028, 111
    %v1531 = vpop.permute.xlu0 %1530
    %v1532 = vsel %vm343, %v1529, %v1531
    %v1533 = vsel %vm343, %v1527, %v1529
    %v1534 = vsel %vm343, %v1525, %v1527
    %v1535 = vsel %vm343, %v1531, %v1525
    %v1536 = vmul.f32 %v1534, %v354
    %v1537 = vmul.f32 %v1533, %v358
    %v1538 = vmul.f32 %v1532, %v362
    %v1539 = vmul.f32 %v1535, %v366
    %1541 = vset.pattern.permute.xlu0 0
    %1542 = vperm.xlu0 %1541, %v52
    %v1543 = vpop.permute.xlu0 %1542
    %v1544 = vrot.slane %v50, 4
    %vm1545 = vcmask 1040384
    %v1546 = vrot.slane %v378, 7
    %v1547 = vrot.slane %v1543, 7
    %v1548 = vsel %vm1545, %v1546, %v1547
    %v1550 = vsel %vm380, %v1544, 0
    %1552 = vmatprep.subr.mxu0 %v1425
    %1553 = vmatpush1.msra.mxu0 %v1424
    %1554 = vmatprep.subr.mxu0 %v1441
    %1555 = vmatpush1.msra.mxu0 %v1440
    %1556 = vmatprep.subr.mxu0 %v1457
    %1557 = vmatpush1.msra.mxu0 %v1456
    %1558 = vmatprep.subr.mxu0 %v1473
    %1559 = vmatpush1.msra.mxu0 %v1472
    %1560 = vmatprep.subr.mxu0 %v1026
    %1561 = vmatpush1.msra.mxu0 %v1025
    %1562 = vmatprep.subr.mxu0 %v1489
    %1563 = vmatpush1.msra.mxu0 %v1488
    %1564 = vmatprep.subr.mxu0 %v1505
    %1565 = vmatpush1.msra.mxu0 %v1504
    %1566 = vmatprep.subr.mxu0 %v1521
    %1567 = vmatpush1.msra.mxu0 %v1520
    %1568 = vmatprep.subr.mxu0 %v1537
    %1569 = vmatpush1.msra.mxu0 %v1536
    %1570 = vmatprep.subr.mxu0 0.0
    %1571 = vmatpush1.msra.mxu0 0.0
    %1572 = vmatprep.subr.mxu0 0.0
    %1573 = vmatpush1.msra.mxu0 0.0
    %1574 = vmatprep.subr.mxu0 0.0
    %1575 = vmatpush1.msra.mxu0 0.0
    %1576 = vmatprep.subr.mxu0 0.0
    %1577 = vmatpush1.msra.mxu0 0.0
    %1578 = vmatprep.subr.mxu0 0.0
    %1579 = vmatpush1.msra.mxu0 0.0
    %1580 = vmatprep.subr.mxu0 0.0
    %1581 = vmatpush1.msra.mxu0 0.0
    %1582 = vmatprep.subr.mxu0 0.0
    %1583 = vmatpush1.msra.mxu0 0.0
    %1584 = vmatprep.subr.mxu0 0.0
    %1585 = vmatpush1.msra.mxu0 0.0
    %1586 = vmatprep.subr.mxu0 0.0
    %1587 = vmatpush1.msra.mxu0 0.0
    %1588 = vmatprep.subr.mxu0 0.0
    %1589 = vmatpush1.msra.mxu0 0.0
    %1590 = vmatprep.subr.mxu0 0.0
    %1591 = vmatpush1.msra.mxu0 0.0
    %1592 = vmatprep.subr.mxu0 0.0
    %1593 = vmatpush1.msra.mxu0 0.0
    %1594 = vmatprep.subr.mxu0 0.0
    %1595 = vmatpush1.msra.mxu0 0.0
    %1596 = vmatprep.subr.mxu0 0.0
    %1597 = vmatpush1.msra.mxu0 0.0
    %1598 = vmatprep.subr.mxu0 0.0
    %1599 = vmatpush1.msra.mxu0 0.0
    %1600 = vmatprep.subr.mxu0 0.0
    %1601 = vmatpush1.msra.mxu0 0.0
    %1602 = vmatprep.subr.mxu0 0.0
    %1603 = vmatpush1.msra.mxu0 0.0
    %1604 = vmatprep.subr.mxu0 0.0
    %1605 = vmatpush1.msra.mxu0 0.0
    %1606 = vmatprep.subr.mxu0 0.0
    %1607 = vmatpush1.msra.mxu0 0.0
    %1608 = vmatprep.subr.mxu0 0.0
    %1609 = vmatpush1.msra.mxu0 0.0
    %1610 = vmatprep.subr.mxu0 0.0
    %1611 = vmatpush1.msra.mxu0 0.0
    %1612 = vmatprep.subr.mxu0 0.0
    %1613 = vmatpush1.msra.mxu0 0.0
    %1614 = vmatprep.subr.mxu0 0.0
    %1615 = vmatpush1.msra.mxu0 0.0
    %1616 = vmatprep.mubr.f32.mxu0 0.0
    %1617 = vmatmul.mubr.f32.gmra.mrb[0].mxu0 %v1550
    %v1618 = vpop.f32.mrb[0].mxu0
    %v1619 = vadd.f32 %v1548, %v1618
    %v1620 = vpop.f32.mrb[0].mxu0
    %v1621 = vadd.f32 %v1548, %v1620
    %1622 = vdwg.mxu0
    %1623 = vmatprep.subr.mxu0 %v1427
    %1624 = vmatpush1.msra.mxu0 %v1426
    %1625 = vmatprep.subr.mxu0 %v1443
    %1626 = vmatpush1.msra.mxu0 %v1442
    %1627 = vmatprep.subr.mxu0 %v1459
    %1628 = vmatpush1.msra.mxu0 %v1458
    %1629 = vmatprep.subr.mxu0 %v1475
    %1630 = vmatpush1.msra.mxu0 %v1474
    %1631 = vmatprep.subr.mxu0 %v1028
    %1632 = vmatpush1.msra.mxu0 %v1027
    %1633 = vmatprep.subr.mxu0 %v1491
    %1634 = vmatpush1.msra.mxu0 %v1490
    %1635 = vmatprep.subr.mxu0 %v1507
    %1636 = vmatpush1.msra.mxu0 %v1506
    %1637 = vmatprep.subr.mxu0 %v1523
    %1638 = vmatpush1.msra.mxu0 %v1522
    %1639 = vmatprep.subr.mxu0 %v1539
    %1640 = vmatpush1.msra.mxu0 %v1538
    %1641 = vmatprep.subr.mxu0 0.0
    %1642 = vmatpush1.msra.mxu0 0.0
    %1643 = vmatprep.subr.mxu0 0.0
    %1644 = vmatpush1.msra.mxu0 0.0
    %1645 = vmatprep.subr.mxu0 0.0
    %1646 = vmatpush1.msra.mxu0 0.0
    %1647 = vmatprep.subr.mxu0 0.0
    %1648 = vmatpush1.msra.mxu0 0.0
    %1649 = vmatprep.subr.mxu0 0.0
    %1650 = vmatpush1.msra.mxu0 0.0
    %1651 = vmatprep.subr.mxu0 0.0
    %1652 = vmatpush1.msra.mxu0 0.0
    %1653 = vmatprep.subr.mxu0 0.0
    %1654 = vmatpush1.msra.mxu0 0.0
    %1655 = vmatprep.subr.mxu0 0.0
    %1656 = vmatpush1.msra.mxu0 0.0
    %1657 = vmatprep.subr.mxu0 0.0
    %1658 = vmatpush1.msra.mxu0 0.0
    %1659 = vmatprep.subr.mxu0 0.0
    %1660 = vmatpush1.msra.mxu0 0.0
    %1661 = vmatprep.subr.mxu0 0.0
    %1662 = vmatpush1.msra.mxu0 0.0
    %1663 = vmatprep.subr.mxu0 0.0
    %1664 = vmatpush1.msra.mxu0 0.0
    %1665 = vmatprep.subr.mxu0 0.0
    %1666 = vmatpush1.msra.mxu0 0.0
    %1667 = vmatprep.subr.mxu0 0.0
    %1668 = vmatpush1.msra.mxu0 0.0
    %1669 = vmatprep.subr.mxu0 0.0
    %1670 = vmatpush1.msra.mxu0 0.0
    %1671 = vmatprep.subr.mxu0 0.0
    %1672 = vmatpush1.msra.mxu0 0.0
    %1673 = vmatprep.subr.mxu0 0.0
    %1674 = vmatpush1.msra.mxu0 0.0
    %1675 = vmatprep.subr.mxu0 0.0
    %1676 = vmatpush1.msra.mxu0 0.0
    %1677 = vmatprep.subr.mxu0 0.0
    %1678 = vmatpush1.msra.mxu0 0.0
    %1679 = vmatprep.subr.mxu0 0.0
    %1680 = vmatpush1.msra.mxu0 0.0
    %1681 = vmatprep.subr.mxu0 0.0
    %1682 = vmatpush1.msra.mxu0 0.0
    %1683 = vmatprep.subr.mxu0 0.0
    %1684 = vmatpush1.msra.mxu0 0.0
    %1685 = vmatprep.subr.mxu0 0.0
    %1686 = vmatpush1.msra.mxu0 0.0
    %1687 = vmatprep.mubr.f32.mxu0 0.0
    %1688 = vmatmul.mubr.f32.gmra.mrb[0].mxu0 %v1550
    %v1689 = vpop.f32.mrb[0].mxu0
    %v1690 = vadd.f32 %v1548, %v1689
    %v1691 = vpop.f32.mrb[0].mxu0
    %v1692 = vadd.f32 %v1548, %v1691
    %1693 = vdwg.mxu0
    %v1694 = vmax.f32 %v1619, 0.0
    %v1695 = vmax.f32 %v1621, 0.0
    %v1696 = vmax.f32 %v1690, 0.0
    %v1697 = vmax.f32 %v1692, 0.0
    %v1703 = vrot.slane %v1694, 5
    %v1704 = vrot.slane %v1695, 5
    %v1705 = vrot.slane %v1696, 5
    %v1706 = vrot.slane %v1697, 5
    %v1711 = vmul.f32 %v1543, %v1703
    %v1712 = vmul.f32 %v1543, %v1704
    %v1713 = vmul.f32 %v1543, %v1705
    %v1714 = vmul.f32 %v1543, %v1706
    %v1719 = vrot.slane %v1711, 3
    %v1720 = vrot.slane %v1712, 3
    %v1721 = vrot.slane %v1713, 3
    %v1722 = vrot.slane %v1714, 3
    %v1727 = vsel %vm735, %v1719, 0.0
    %v1728 = vrot.slane %v1727, 4
    %v1729 = vadd.f32 %v1727, %v1728
    %v1730 = vrot.slane %v1729, 2
    %v1731 = vadd.f32 %v1729, %v1730
    %v1732 = vrot.slane %v1731, 1
    %v1733 = vadd.f32 %v1731, %v1732
    %v1734 = vsel %vm735, %v1720, 0.0
    %v1735 = vrot.slane %v1734, 4
    %v1736 = vadd.f32 %v1734, %v1735
    %v1737 = vrot.slane %v1736, 2
    %v1738 = vadd.f32 %v1736, %v1737
    %v1739 = vrot.slane %v1738, 1
    %v1740 = vadd.f32 %v1738, %v1739
    %v1741 = vsel %vm735, %v1721, 0.0
    %v1742 = vrot.slane %v1741, 4
    %v1743 = vadd.f32 %v1741, %v1742
    %v1744 = vrot.slane %v1743, 2
    %v1745 = vadd.f32 %v1743, %v1744
    %v1746 = vrot.slane %v1745, 1
    %v1747 = vadd.f32 %v1745, %v1746
    %v1748 = vsel %vm735, %v1722, 0.0
    %v1749 = vrot.slane %v1748, 4
    %v1750 = vadd.f32 %v1748, %v1749
    %v1751 = vrot.slane %v1750, 2
    %v1752 = vadd.f32 %v1750, %v1751
    %v1753 = vrot.slane %v1752, 1
    %v1754 = vadd.f32 %v1752, %v1753
    %v1755 = vadd.f32 %v1733, %v1543
    %v1756 = vadd.f32 %v1740, %v1543
    %v1757 = vadd.f32 %v1747, %v1543
    %v1758 = vadd.f32 %v1754, %v1543
    %v1759 = vxor.u32 %v1755, 2147483648
    %v1760 = vxor.u32 %v1756, 2147483648
    %v1761 = vxor.u32 %v1757, 2147483648
    %v1762 = vxor.u32 %v1758, 2147483648
    %v1763 = vmul.f32 %v1759, 1.442695
    %v1764 = vpow.pop %v1763
    %v1765 = vmul.f32 %v1760, 1.442695
    %v1766 = vpow.pop %v1765
    %v1767 = vmul.f32 %v1761, 1.442695
    %v1768 = vpow.pop %v1767
    %v1769 = vmul.f32 %v1762, 1.442695
    %v1770 = vpow.pop %v1769
    %v1771 = vadd.f32 %v1764, 1.0
    %v1772 = vadd.f32 %v1766, 1.0
    %v1773 = vadd.f32 %v1768, 1.0
    %v1774 = vadd.f32 %v1770, 1.0
    %v1775 = vrcp.pop %v1771
    %v1776 = vmul.f32 1.0, %v1775
    %v1777 = vrcp.pop %v1772
    %v1778 = vmul.f32 1.0, %v1777
    %v1779 = vrcp.pop %v1773
    %v1780 = vmul.f32 1.0, %v1779
    %v1781 = vrcp.pop %v1774
    %v1782 = vmul.f32 1.0, %v1781
    %vm1783 = vcmp.ne.f32.partialorder %v1776, %v1776
    %vm1784 = vcmp.ne.f32.partialorder %v1778, %v1778
    %vm1785 = vcmp.ne.f32.partialorder %v1780, %v1780
    %vm1786 = vcmp.ne.f32.partialorder %v1782, %v1782
    %v1787 = vsel %vm1783, 0.0, %v1776
    %v1788 = vsel %vm1784, 0.0, %v1778
    %v1789 = vsel %vm1785, 0.0, %v1780
    %v1790 = vsel %vm1786, 0.0, %v1782
    %v1795 = vrot.slane %v1408, 5
    %v1796 = vrot.slane %v1409, 5
    %v1797 = vrot.slane %v1410, 5
    %v1798 = vrot.slane %v1411, 5
    %v1803 = vsub.f32 %v1787, %v1795
    %v1804 = vsub.f32 %v1788, %v1796
    %v1805 = vsub.f32 %v1789, %v1797
    %v1806 = vsub.f32 %v1790, %v1798
    %v1807 = vadd.f32 %v1803, 1e-06
    %v1808 = vadd.f32 %v1804, 1e-06
    %v1809 = vadd.f32 %v1805, 1e-06
    %v1810 = vadd.f32 %v1806, 1e-06
    %v1811 = vstv %s1338
    %v1812 = vmul.f32 %v1807, %v1811
    %v1813 = vmul.f32 %v1808, %v1811
    %v1814 = vmul.f32 %v1809, %v1811
    %v1815 = vmul.f32 %v1810, %v1811
    %v1816 = vxor.u32 %v1812, 2147483648
    %v1817 = vxor.u32 %v1813, 2147483648
    %v1818 = vxor.u32 %v1814, 2147483648
    %v1819 = vxor.u32 %v1815, 2147483648
    %v1820 = vmul.f32 %v1816, 1.442695
    %v1821 = vpow.pop %v1820
    %v1822 = vmul.f32 %v1817, 1.442695
    %v1823 = vpow.pop %v1822
    %v1824 = vmul.f32 %v1818, 1.442695
    %v1825 = vpow.pop %v1824
    %v1826 = vmul.f32 %v1819, 1.442695
    %v1827 = vpow.pop %v1826
    %v1828 = vadd.f32 %v1821, 1.0
    %v1829 = vadd.f32 %v1823, 1.0
    %v1830 = vadd.f32 %v1825, 1.0
    %v1831 = vadd.f32 %v1827, 1.0
    %v1832 = vrcp.pop %v1828
    %v1833 = vmul.f32 1.0, %v1832
    %v1834 = vrcp.pop %v1829
    %v1835 = vmul.f32 1.0, %v1834
    %v1836 = vrcp.pop %v1830
    %v1837 = vmul.f32 1.0, %v1836
    %v1838 = vrcp.pop %v1831
    %v1839 = vmul.f32 1.0, %v1838
    %v1844 = vrot.slane %v1755, 7
    %v1845 = vrot.slane %v1756, 7
    %v1846 = vrot.slane %v1757, 7
    %v1847 = vrot.slane %v1758, 7
    %v1856 = vrot.slane %v1787, 6
    %v1857 = vrot.slane %v1788, 6
    %v1858 = vrot.slane %v1789, 6
    %v1859 = vrot.slane %v1790, 6
    %v1868 = vrot.slane %v1833, 5
    %v1869 = vrot.slane %v1835, 5
    %v1870 = vrot.slane %v1837, 5
    %v1871 = vrot.slane %v1839, 5
    %v1880 = vrot.slane %v1812, 4
    %v1881 = vrot.slane %v1813, 4
    %v1882 = vrot.slane %v1814, 4
    %v1883 = vrot.slane %v1815, 4
    %v1888 = vsel %vm1545, %v1844, %v1856
    %v1889 = vsel %vm1545, %v1845, %v1857
    %v1890 = vsel %vm1545, %v1846, %v1858
    %v1891 = vsel %vm1545, %v1847, %v1859
    %v1892 = vsel %vm730, %v1888, %v1868
    %v1893 = vsel %vm730, %v1889, %v1869
    %v1894 = vsel %vm730, %v1890, %v1870
    %v1895 = vsel %vm730, %v1891, %v1871
    %vm1896 = vcmask 1042432
    %v1897 = vsel %vm1896, %v1892, %v1880
    %v1898 = vsel %vm1896, %v1893, %v1881
    %v1899 = vsel %vm1896, %v1894, %v1882
    %v1900 = vsel %vm1896, %v1895, %v1883
    %v1905 = vcombine.low %v1897, %v1898
    %v1906 = vcombine.low %v1899, %v1900
    %1909 = vst [vmem:[#allocation5] sm:$0xff] %v1905
    %1910 = vst [vmem:[#allocation5 + $0x8] sm:$0xff] %v1906
    %v1911 = vrot.slane %v1345, 4
    %v1914 = vrot.slane %v1335, 3
    %v1916 = vsel %vm1545, %v1911, %v1914
    %1917 = vst.msk [vmem:[#allocation6] sm:$0x3] %vm1321, %v1916
    // Predicated region
    $region38: #{tpu_custom_call.1} parent=1 // pred_check
      _
    $region39: #{tpu_custom_call.1} parent=1 // pred_check_branch
      %1919 = sbr.rel (0) target = $region41
    $region40: #{tpu_custom_call.1} parent=1 // pred_region
      %s1921 = ssub.s32 256, 256
      %1922 = vsyncadd [#allocation3], %s1921
      %s1924 = sshll.u32 [#allocation5], 4
      %s1925 = int_to_ptr.vmem [resolvable:$true] %s1924
      %1927 = dma.vmem_to_hbm [thread:$0]  %s1925, 256, %s8, [#allocation3]
    $region41: #{tpu_custom_call.1} parent=1 // pred_fallthru
      _
    // Predicated region
    $region42: #{tpu_custom_call.1} parent=1 // pred_check
      _
    $region43: #{tpu_custom_call.1} parent=1 // pred_check_branch
      %1929 = sbr.rel (0) target = $region45
    $region44: #{tpu_custom_call.1} parent=1 // pred_region
      %s1931 = ssub.s32 32, 32
      %1932 = vsyncadd [#allocation7], %s1931
      %s1934 = sshll.u32 [#allocation6], 4
      %s1935 = int_to_ptr.vmem [resolvable:$true] %s1934
      %1937 = dma.vmem_to_hbm [thread:$0]  %s1935, 32, %s9, [#allocation7]
    $region45: #{tpu_custom_call.1} parent=1 // pred_fallthru
      _
    // Predicated region
    $region46: #{tpu_custom_call.1} parent=1 // pred_check
      _
    $region47: #{tpu_custom_call.1} parent=1 // pred_check_branch
      %1939 = sbr.rel (0) target = $region49
    $region48: #{tpu_custom_call.1} parent=1 // pred_region
      %1940 = dma.done [#allocation3], 256
    $region49: #{tpu_custom_call.1} parent=1 // pred_fallthru
      _
    // Predicated region
    $region50: #{tpu_custom_call.1} parent=1 // pred_check
      _
    $region51: #{tpu_custom_call.1} parent=1 // pred_check_branch
      %1942 = sbr.rel (0) target = $region53
    $region52: #{tpu_custom_call.1} parent=1 // pred_region
      %1943 = dma.done [#allocation7], 32
    $region53: #{tpu_custom_call.1} parent=1 // pred_fallthru
      _
    %1944 = vsyncpa [#allocation3], 1
    %1945 = vsyncpa [#allocation7], 1
    %1946 = vsyncpa [#allocation4], 1

</llo_original>
